<compile_context>
chip_gen: v7x
topology: tpu7x:2x2x1
jax: 0.10.0
libtpu: 0.0.40
codegen_flags: <defaults>
</compile_context>

<pallas_src>
import functools
import math

import jax
import jax.numpy as jnp
from jax.experimental import pallas as pl
from jax.experimental.pallas import tpu as pltpu

LEAKAGE = 0.1
BN_EPS = 1e-5

_VMEM_LIMIT = 32 * 1024 * 1024      # safe on v5e / v6e / v7x
_TILE_BUDGET = 8 * 1024 * 1024      # target working set for double-buffered M tiles


# ----------------------------- Pallas kernels ------------------------------

def _conv_stats_kernel(total_rows, p_ref, w_ref, b_ref, y_ref, sum_ref, sq_ref):
    """y = patches @ W + b for one M tile; accumulate per-channel sum / sumsq."""
    tile_m = p_ref.shape[0]
    y = jnp.dot(p_ref[...], w_ref[...], preferred_element_type=jnp.float32) + b_ref[...]
    y_ref[...] = y

    row = pl.program_id(0) * tile_m + jax.lax.broadcasted_iota(jnp.int32, (tile_m, 1), 0)
    ym = jnp.where(row < total_rows, y, 0.0)

    @pl.when(pl.program_id(0) == 0)
    def _init():
        sum_ref[...] = jnp.zeros_like(sum_ref)
        sq_ref[...] = jnp.zeros_like(sq_ref)

    sum_ref[...] += jnp.sum(ym, axis=0, keepdims=True)
    sq_ref[...] += jnp.sum(ym * ym, axis=0, keepdims=True)


def _conv_proj_stats_kernel(total_rows, cin, p_ref, w_ref, b_ref, pw_ref, pb_ref,
                            y_ref, proj_ref, sum_ref, sq_ref):
    """Block-1 pass A: 3x3 stride-2 conv + fused 1x1 stride-2 projection."""
    tile_m = p_ref.shape[0]
    p = p_ref[...]
    y = jnp.dot(p, w_ref[...], preferred_element_type=jnp.float32) + b_ref[...]
    y_ref[...] = y

    # 1x1 stride-2 projection input == centre tap (kh=1, kw=1) of the patches.
    centre = p[:, 4 * cin:5 * cin]
    proj_ref[...] = (jnp.dot(centre, pw_ref[...], preferred_element_type=jnp.float32)
                     + pb_ref[...])

    row = pl.program_id(0) * tile_m + jax.lax.broadcasted_iota(jnp.int32, (tile_m, 1), 0)
    ym = jnp.where(row < total_rows, y, 0.0)

    @pl.when(pl.program_id(0) == 0)
    def _init():
        sum_ref[...] = jnp.zeros_like(sum_ref)
        sq_ref[...] = jnp.zeros_like(sq_ref)

    sum_ref[...] += jnp.sum(ym, axis=0, keepdims=True)
    sq_ref[...] += jnp.sum(ym * ym, axis=0, keepdims=True)


def _bn_lrelu_kernel(total_rows, y_ref, sum_ref, sq_ref, g_ref, be_ref, o_ref):
    inv_m = 1.0 / total_rows
    mean = sum_ref[...] * inv_m
    var = jnp.maximum(sq_ref[...] * inv_m - mean * mean, 0.0)   # biased (training-mode) var
    scale = g_ref[...] * jax.lax.rsqrt(var + BN_EPS)
    shift = be_ref[...] - mean * scale
    z = y_ref[...] * scale + shift
    o_ref[...] = jnp.where(z >= 0, z, LEAKAGE * z)


def _bn_lrelu_add_kernel(total_rows, y_ref, sum_ref, sq_ref, g_ref, be_ref, r_ref, o_ref):
    inv_m = 1.0 / total_rows
    mean = sum_ref[...] * inv_m
    var = jnp.maximum(sq_ref[...] * inv_m - mean * mean, 0.0)
    scale = g_ref[...] * jax.lax.rsqrt(var + BN_EPS)
    shift = be_ref[...] - mean * scale
    z = y_ref[...] * scale + shift
    o_ref[...] = jnp.where(z >= 0, z, LEAKAGE * z) + r_ref[...]


# ----------------------------- Pallas wrappers ------------------------------

def _pick_tile_m(m, row_bytes):
    """Largest M tile (multiple of 8) whose double-buffered working set fits the budget."""
    tile = 2048
    while tile > 8 and 2 * tile * row_bytes > _TILE_BUDGET:
        tile //= 2
    m8 = ((m + 7) // 8) * 8
    return max(8, min(tile, m8))


def _row_spec(tile_m, width):
    return pl.BlockSpec((tile_m, width), lambda i: (i, 0))


def _full_spec(shape):
    return pl.BlockSpec(shape, lambda i, _n=len(shape): (0,) * _n)


def conv_bias_stats(patches, w2d, bias, proj_w2d=None, proj_b=None, cin=None):
    """Tiled conv-as-matmul + bias; also emits per-channel (1, N) sum / sum-of-squares.

    If proj_w2d is given, additionally computes the fused 1x1 stride-2 projection
    from the centre-tap columns of the same patch tile.
    """
    M, K = patches.shape
    N = w2d.shape[1]
    has_proj = proj_w2d is not None

    row_bytes = K * 2 + N * 4 + (N * 4 if has_proj else 0)
    tile_m = _pick_tile_m(M, row_bytes)
    grid = (pl.cdiv(M, tile_m),)

    b2 = bias.reshape(1, N).astype(jnp.float32)

    flops = 2 * M * K * N + (2 * M * int(cin or 0) * N if has_proj else 0)
    bytes_accessed = int(patches.size) * 2 + int(w2d.size) * 2 \
        + (M * N + 2 * N) * 4 + (M * N * 4 if has_proj else 0)

    if has_proj:
        pb2 = proj_b.reshape(1, N).astype(jnp.float32)
        kernel = functools.partial(_conv_proj_stats_kernel, M, cin)
        out_shape = (jax.ShapeDtypeStruct((M, N), jnp.float32),   # y
                     jax.ShapeDtypeStruct((M, N), jnp.float32),   # projection
                     jax.ShapeDtypeStruct((1, N), jnp.float32),   # sum
                     jax.ShapeDtypeStruct((1, N), jnp.float32))   # sumsq
        in_specs = [_row_spec(tile_m, K), _full_spec((K, N)), _full_spec((1, N)),
                    _full_spec((cin, N)), _full_spec((1, N))]
        out_specs = (_row_spec(tile_m, N), _row_spec(tile_m, N),
                     _full_spec((1, N)), _full_spec((1, N)))
        args = (patches, w2d, b2, proj_w2d, pb2)
    else:
        kernel = functools.partial(_conv_stats_kernel, M)
        out_shape = (jax.ShapeDtypeStruct((M, N), jnp.float32),
                     jax.ShapeDtypeStruct((1, N), jnp.float32),
                     jax.ShapeDtypeStruct((1, N), jnp.float32))
        in_specs = [_row_spec(tile_m, K), _full_spec((K, N)), _full_spec((1, N))]
        out_specs = (_row_spec(tile_m, N), _full_spec((1, N)), _full_spec((1, N)))
        args = (patches, w2d, b2)

    return pl.pallas_call(
        kernel,
        out_shape=out_shape,
        grid=grid,
        in_specs=in_specs,
        out_specs=out_specs,
        compiler_params=pltpu.CompilerParams(
            dimension_semantics=("arbitrary",),      # stats accumulate across M tiles
            vmem_limit_bytes=_VMEM_LIMIT),
        cost_estimate=pl.CostEstimate(flops=int(flops), transcendentals=0,
                                      bytes_accessed=int(bytes_accessed)),
    )(*args)


def bn_lrelu(y, s, sq, gamma, beta, residual=None):
    """Tiled BatchNorm(train)-normalize + LeakyReLU, optional fused residual add."""
    M, N = y.shape
    row_bytes = N * 4 * (3 if residual is not None else 2)
    tile_m = _pick_tile_m(M, row_bytes)
    grid = (pl.cdiv(M, tile_m),)

    g2 = gamma.reshape(1, N).astype(jnp.float32)
    be2 = beta.reshape(1, N).astype(jnp.float32)

    if residual is not None:
        kernel = functools.partial(_bn_lrelu_add_kernel, M)
        in_specs = [_row_spec(tile_m, N), _full_spec((1, N)), _full_spec((1, N)),
                    _full_spec((1, N)), _full_spec((1, N)), _row_spec(tile_m, N)]
        args = (y, s, sq, g2, be2, residual)
    else:
        kernel = functools.partial(_bn_lrelu_kernel, M)
        in_specs = [_row_spec(tile_m, N), _full_spec((1, N)), _full_spec((1, N)),
                    _full_spec((1, N)), _full_spec((1, N))]
        args = (y, s, sq, g2, be2)

    return pl.pallas_call(
        kernel,
        out_shape=jax.ShapeDtypeStruct((M, N), jnp.float32),
        grid=grid,
        in_specs=in_specs,
        out_specs=_row_spec(tile_m, N),
        compiler_params=pltpu.CompilerParams(
            dimension_semantics=("parallel",),
            vmem_limit_bytes=_VMEM_LIMIT),
        cost_estimate=pl.CostEstimate(
            flops=int(6 * M * N), transcendentals=int(N),
            bytes_accessed=int((2 + (1 if residual is not None else 0)) * M * N * 4)),
    )(*args)


# ------------------------------- glue (JAX) --------------------------------

def _reflect_pad_nhwc(x, pad):
    if pad == 0:
        return x
    return jnp.pad(x, ((0, 0), (pad, pad), (pad, pad), (0, 0)), mode="reflect")


def _im2col_nhwc(x, k, stride, pad):
    """x: (B, H, W, C) -> patches (B*Ho*Wo, k*k*C), plus (B, Ho, Wo)."""
    # TODO(synk): move im2col into the kernel (halo DMA with memory_space=pl.ANY)
    # to avoid the ~9x HBM materialisation of the patch matrix.
    B, H, W, C = x.shape
    xp = _reflect_pad_nhwc(x, pad)
    Ho = (H + 2 * pad - k) // stride + 1
    Wo = (W + 2 * pad - k) // stride + 1
    cols = []
    for kh in range(k):
        for kw in range(k):
            cols.append(xp[:, kh:kh + stride * Ho:stride, kw:kw + stride * Wo:stride, :])
    patches = jnp.stack(cols, axis=3)          # (B, Ho, Wo, k*k, C)
    return patches.reshape(B * Ho * Wo, k * k * C), (B, Ho, Wo)


def _torch_weight_to_matmul(w):
    """(Cout, Cin, kh, kw) -> (kh*kw*Cin, Cout), matching im2col patch ordering."""
    Cout, Cin, kh, kw = w.shape
    return jnp.transpose(w, (2, 3, 1, 0)).reshape(kh * kw * Cin, Cout)


# ------------------------------ parameter init ------------------------------

def init_downsample_params(key, in_channels):
    C, OC = in_channels, 2 * in_channels
    ks = jax.random.split(key, 8)

    # projection: Conv2dReLUInit(C, 2C, 1, leakage=1, stride=2)
    proj_std = math.sqrt(2.0 / ((1 + 1.0) * 1 * 1 * C))
    proj_w = proj_std * jax.random.normal(ks[0], (OC, C, 1, 1), jnp.float32)
    proj_bound = 1.0 / math.sqrt(C * 1 * 1)
    proj_b = jax.random.uniform(ks[1], (OC,), jnp.float32, -proj_bound, proj_bound)

    def conv_block_params(kw, kb, cin, cout):
        std = math.sqrt(2.0 / ((1 + LEAKAGE) * 3 * 3 * cin))
        w = std * jax.random.normal(kw, (cout, cin, 3, 3), jnp.float32)
        bound = 1.0 / math.sqrt(cin * 3 * 3)
        b = jax.random.uniform(kb, (cout,), jnp.float32, -bound, bound)
        gamma = jnp.ones((cout,), jnp.float32)
        beta = jnp.zeros((cout,), jnp.float32)
        return dict(w=w, b=b, gamma=gamma, beta=beta)

    blk1 = conv_block_params(ks[2], ks[3], C, OC)    # stride 2
    blk2 = conv_block_params(ks[4], ks[5], OC, OC)   # stride 1
    blk3 = conv_block_params(ks[6], ks[7], OC, OC)   # stride 1

    return dict(proj_w=proj_w, proj_b=proj_b, blocks=[blk1, blk2, blk3])


# ------------------------------- forward pass -------------------------------

def downsample_forward(params, x_nchw):
    """x_nchw: (B, C, H, W) float32 -> (B, 2C, ceil(H/2), ceil(W/2)) float32."""
    x = jnp.transpose(x_nchw, (0, 2, 3, 1)).astype(jnp.float32)  # NHWC
    B, H, W, C = x.shape
    OC = 2 * C

    proj_w2d = _torch_weight_to_matmul(params["proj_w"]).astype(jnp.bfloat16)   # (C, 2C)

    # --- block 1 (3x3 reflect, stride 2) with the 1x1 stride-2 projection fused ---
    patches, (Bb, Ho, Wo) = _im2col_nhwc(x.astype(jnp.bfloat16), 3, 2, 1)
    blk = params["blocks"][0]
    w2d = _torch_weight_to_matmul(blk["w"]).astype(jnp.bfloat16)
    y, proj, s, sq = conv_bias_stats(patches, w2d, blk["b"],
                                     proj_w2d=proj_w2d, proj_b=params["proj_b"], cin=C)
    h = bn_lrelu(y, s, sq, blk["gamma"], blk["beta"])

    # --- blocks 2 & 3 (3x3 reflect, stride 1); residual add fused into block 3 ---
    for idx in (1, 2):
        blk = params["blocks"][idx]
        h_img = h.reshape(Bb, Ho, Wo, OC).astype(jnp.bfloat16)
        patches, _ = _im2col_nhwc(h_img, 3, 1, 1)
        w2d = _torch_weight_to_matmul(blk["w"]).astype(jnp.bfloat16)
        y, s, sq = conv_bias_stats(patches, w2d, blk["b"])
        res = proj if idx == 2 else None
        h = bn_lrelu(y, s, sq, blk["gamma"], blk["beta"], residual=res)

    out = h.reshape(Bb, Ho, Wo, OC)
    return jnp.transpose(out, (0, 3, 1, 2))                        # back to NCHW


# ---------------------------------- main -------------------------------------

if __name__ == "__main__":
    key = jax.random.PRNGKey(0)
    k_param, k_x = jax.random.split(key)

    B, C, H, W = 2, 4, 16, 16
    x = jax.random.normal(k_x, (B, C, H, W), jnp.float32)

    params = init_downsample_params(k_param, C)

    y = jax.jit(downsample_forward)(params, x)
    y = jax.block_until_ready(y)

    assert y.shape == (B, 2 * C, H // 2, W // 2), y.shape
    assert y.dtype == jnp.float32
    assert bool(jnp.all(jnp.isfinite(y)))
    print("KERNEL_OK")
</pallas_src>

<mosaic_0001>
module attributes {stable_mosaic.version = 11 : i64} {
  func.func @_conv_proj_stats_kernel(%arg0: i32, %arg1: memref<128x36xbf16, #tpu.memory_space<vmem>>, %arg2: memref<36x8xbf16, #tpu.memory_space<vmem>>, %arg3: memref<1x8xf32, #tpu.memory_space<vmem>>, %arg4: memref<4x8xbf16, #tpu.memory_space<vmem>>, %arg5: memref<1x8xf32, #tpu.memory_space<vmem>>, %arg6: memref<128x8xf32, #tpu.memory_space<vmem>>, %arg7: memref<128x8xf32, #tpu.memory_space<vmem>>, %arg8: memref<1x8xf32, #tpu.memory_space<vmem>>, %arg9: memref<1x8xf32, #tpu.memory_space<vmem>>) attributes {dimension_semantics = [#tpu.dimension_semantics<arbitrary>], iteration_bounds = array<i64: 1>, scalar_prefetch = 0 : i64, scratch_operands = 0 : i64, tpu.core_type = #tpu.core_type<tc>, window_params = [{transform_indices = @transform_0, window_bounds = array<i64: 128, 36>}, {pipeline_mode = #tpu.pipeline_mode<synchronous>, transform_indices = @transform_1, window_bounds = array<i64: 36, 8>}, {pipeline_mode = #tpu.pipeline_mode<synchronous>, transform_indices = @transform_2, window_bounds = array<i64: 1, 8>}, {pipeline_mode = #tpu.pipeline_mode<synchronous>, transform_indices = @transform_3, window_bounds = array<i64: 4, 8>}, {pipeline_mode = #tpu.pipeline_mode<synchronous>, transform_indices = @transform_4, window_bounds = array<i64: 1, 8>}, {transform_indices = @transform_5, window_bounds = array<i64: 128, 8>}, {transform_indices = @transform_6, window_bounds = array<i64: 128, 8>}, {pipeline_mode = #tpu.pipeline_mode<synchronous>, transform_indices = @transform_7, window_bounds = array<i64: 1, 8>}, {pipeline_mode = #tpu.pipeline_mode<synchronous>, transform_indices = @transform_8, window_bounds = array<i64: 1, 8>}]} {
    %c0 = arith.constant 0 : index
    %c0_0 = arith.constant 0 : index
    %0 = vector.load %arg1[%c0, %c0_0] : memref<128x36xbf16, #tpu.memory_space<vmem>>, vector<128x36xbf16>
    %c0_1 = arith.constant 0 : index
    %c0_2 = arith.constant 0 : index
    %1 = vector.load %arg2[%c0_1, %c0_2] : memref<36x8xbf16, #tpu.memory_space<vmem>>, vector<36x8xbf16>
    %cst = arith.constant dense<0.000000e+00> : vector<128x8xf32>
    %2 = tpu.matmul %0, %1, %cst {dimension_numbers = #tpu.dot_dimension_numbers<[1], [0], [0], [1], [0, 0, 1, 1], [], []>} : vector<128x36xbf16>, vector<36x8xbf16>, vector<128x8xf32> -> vector<128x8xf32>
    %c0_3 = arith.constant 0 : index
    %c0_4 = arith.constant 0 : index
    %3 = vector.load %arg3[%c0_3, %c0_4] : memref<1x8xf32, #tpu.memory_space<vmem>>, vector<1x8xf32>
    %4 = vector.broadcast %3 : vector<1x8xf32> to vector<128x8xf32>
    %5 = arith.addf %2, %4 : vector<128x8xf32>
    %c0_5 = arith.constant 0 : index
    %c0_6 = arith.constant 0 : index
    %6 = vector.load %arg6[%c0_5, %c0_6] : memref<128x8xf32, #tpu.memory_space<vmem>>, vector<128x8xf32>
    tpu.vector_store %arg6[%c0_5, %c0_6], %5 {strides = array<i32>} : memref<128x8xf32, #tpu.memory_space<vmem>>, vector<128x8xf32>,
    %7 = vector.extract_strided_slice %0 {offsets = [0, 16], sizes = [128, 4], strides = [1, 1]} : vector<128x36xbf16> to vector<128x4xbf16>
    %c0_7 = arith.constant 0 : index
    %c0_8 = arith.constant 0 : index
    %8 = vector.load %arg4[%c0_7, %c0_8] : memref<4x8xbf16, #tpu.memory_space<vmem>>, vector<4x8xbf16>
    %cst_9 = arith.constant dense<0.000000e+00> : vector<128x8xf32>
    %9 = tpu.matmul %7, %8, %cst_9 {dimension_numbers = #tpu.dot_dimension_numbers<[1], [0], [0], [1], [0, 0, 1, 1], [], []>} : vector<128x4xbf16>, vector<4x8xbf16>, vector<128x8xf32> -> vector<128x8xf32>
    %c0_10 = arith.constant 0 : index
    %c0_11 = arith.constant 0 : index
    %10 = vector.load %arg5[%c0_10, %c0_11] : memref<1x8xf32, #tpu.memory_space<vmem>>, vector<1x8xf32>
    %11 = vector.broadcast %10 : vector<1x8xf32> to vector<128x8xf32>
    %12 = arith.addf %9, %11 : vector<128x8xf32>
    %c0_12 = arith.constant 0 : index
    %c0_13 = arith.constant 0 : index
    %13 = vector.load %arg7[%c0_12, %c0_13] : memref<128x8xf32, #tpu.memory_space<vmem>>, vector<128x8xf32>
    tpu.vector_store %arg7[%c0_12, %c0_13], %12 {strides = array<i32>} : memref<128x8xf32, #tpu.memory_space<vmem>>, vector<128x8xf32>,
    %c128_i32 = arith.constant 128 : i32
    %14 = arith.muli %arg0, %c128_i32 : i32
    %15 = tpu.iota {dimensions = array<i32: 0>} : vector<128x1xi32>
    %16 = vector.broadcast %14 : i32 to vector<128x1xi32>
    %17 = arith.addi %16, %15 : vector<128x1xi32>
    %c128_i32_14 = arith.constant 128 : i32
    %18 = vector.broadcast %c128_i32_14 : i32 to vector<128x1xi32>
    %19 = arith.cmpi slt, %17, %18 : vector<128x1xi32>
    %cst_15 = arith.constant 0.000000e+00 : f32
    %20 = vector.shape_cast %19 : vector<128x1xi1> to vector<128x1xi1>
    %21 = vector.broadcast %20 : vector<128x1xi1> to vector<128x8xi1>
    %22 = vector.broadcast %cst_15 : f32 to vector<128x8xf32>
    %23 = arith.select %21, %5, %22 : vector<128x8xi1>, vector<128x8xf32>
    %c0_i32 = arith.constant 0 : i32
    %24 = arith.cmpi eq, %arg0, %c0_i32 : i32
    %25 = arith.extui %24 : i1 to i32
    %c0_i32_16 = arith.constant 0 : i32
    %26 = arith.cmpi ne, %25, %c0_i32_16 : i32
    scf.if %26 {
      %cst_27 = arith.constant 0.000000e+00 : f32
      %38 = vector.broadcast %cst_27 : f32 to vector<1x8xf32>
      %c0_28 = arith.constant 0 : index
      %c0_29 = arith.constant 0 : index
      %39 = vector.load %arg8[%c0_28, %c0_29] : memref<1x8xf32, #tpu.memory_space<vmem>>, vector<1x8xf32>
      tpu.vector_store %arg8[%c0_28, %c0_29], %38 {strides = array<i32>} : memref<1x8xf32, #tpu.memory_space<vmem>>, vector<1x8xf32>,
      %cst_30 = arith.constant 0.000000e+00 : f32
      %40 = vector.broadcast %cst_30 : f32 to vector<1x8xf32>
      %c0_31 = arith.constant 0 : index
      %c0_32 = arith.constant 0 : index
      %41 = vector.load %arg9[%c0_31, %c0_32] : memref<1x8xf32, #tpu.memory_space<vmem>>, vector<1x8xf32>
      tpu.vector_store %arg9[%c0_31, %c0_32], %40 {strides = array<i32>} : memref<1x8xf32, #tpu.memory_space<vmem>>, vector<1x8xf32>,
    } else {
    }
    %c0_17 = arith.constant 0 : index
    %c0_18 = arith.constant 0 : index
    %27 = vector.load %arg8[%c0_17, %c0_18] : memref<1x8xf32, #tpu.memory_space<vmem>>, vector<1x8xf32>
    %cst_19 = arith.constant dense<0.000000e+00> : vector<8xf32>
    %28 = vector.multi_reduction <add>, %23, %cst_19 [0] : vector<128x8xf32> to vector<8xf32>
    %29 = vector.shape_cast %28 : vector<8xf32> to vector<1x8xf32>
    %30 = arith.addf %27, %29 : vector<1x8xf32>
    %c0_20 = arith.constant 0 : index
    %c0_21 = arith.constant 0 : index
    %31 = vector.load %arg8[%c0_20, %c0_21] : memref<1x8xf32, #tpu.memory_space<vmem>>, vector<1x8xf32>
    tpu.vector_store %arg8[%c0_20, %c0_21], %30 {strides = array<i32>} : memref<1x8xf32, #tpu.memory_space<vmem>>, vector<1x8xf32>,
    %c0_22 = arith.constant 0 : index
    %c0_23 = arith.constant 0 : index
    %32 = vector.load %arg9[%c0_22, %c0_23] : memref<1x8xf32, #tpu.memory_space<vmem>>, vector<1x8xf32>
    %33 = arith.mulf %23, %23 : vector<128x8xf32>
    %cst_24 = arith.constant dense<0.000000e+00> : vector<8xf32>
    %34 = vector.multi_reduction <add>, %33, %cst_24 [0] : vector<128x8xf32> to vector<8xf32>
    %35 = vector.shape_cast %34 : vector<8xf32> to vector<1x8xf32>
    %36 = arith.addf %32, %35 : vector<1x8xf32>
    %c0_25 = arith.constant 0 : index
    %c0_26 = arith.constant 0 : index
    %37 = vector.load %arg9[%c0_25, %c0_26] : memref<1x8xf32, #tpu.memory_space<vmem>>, vector<1x8xf32>
    tpu.vector_store %arg9[%c0_25, %c0_26], %36 {strides = array<i32>} : memref<1x8xf32, #tpu.memory_space<vmem>>, vector<1x8xf32>,
    return
  }
  func.func @transform_0(%arg0: i32) -> (i32, i32) {
    %c0_i32 = arith.constant 0 : i32
    %c0_i32_0 = arith.constant 0 : i32
    return %arg0, %c0_i32 : i32, i32
  }
  func.func @transform_1(%arg0: i32) -> (i32, i32) {
    %c0_i32 = arith.constant 0 : i32
    %c0_i32_0 = arith.constant 0 : i32
    %c0_i32_1 = arith.constant 0 : i32
    return %c0_i32, %c0_i32_0 : i32, i32
  }
  func.func @transform_2(%arg0: i32) -> (i32, i32) {
    %c0_i32 = arith.constant 0 : i32
    %c0_i32_0 = arith.constant 0 : i32
    %c0_i32_1 = arith.constant 0 : i32
    return %c0_i32, %c0_i32_0 : i32, i32
  }
  func.func @transform_3(%arg0: i32) -> (i32, i32) {
    %c0_i32 = arith.constant 0 : i32
    %c0_i32_0 = arith.constant 0 : i32
    %c0_i32_1 = arith.constant 0 : i32
    return %c0_i32, %c0_i32_0 : i32, i32
  }
  func.func @transform_4(%arg0: i32) -> (i32, i32) {
    %c0_i32 = arith.constant 0 : i32
    %c0_i32_0 = arith.constant 0 : i32
    %c0_i32_1 = arith.constant 0 : i32
    return %c0_i32, %c0_i32_0 : i32, i32
  }
  func.func @transform_5(%arg0: i32) -> (i32, i32) {
    %c0_i32 = arith.constant 0 : i32
    %c0_i32_0 = arith.constant 0 : i32
    return %arg0, %c0_i32 : i32, i32
  }
  func.func @transform_6(%arg0: i32) -> (i32, i32) {
    %c0_i32 = arith.constant 0 : i32
    %c0_i32_0 = arith.constant 0 : i32
    return %arg0, %c0_i32 : i32, i32
  }
  func.func @transform_7(%arg0: i32) -> (i32, i32) {
    %c0_i32 = arith.constant 0 : i32
    %c0_i32_0 = arith.constant 0 : i32
    %c0_i32_1 = arith.constant 0 : i32
    return %c0_i32, %c0_i32_0 : i32, i32
  }
  func.func @transform_8(%arg0: i32) -> (i32, i32) {
    %c0_i32 = arith.constant 0 : i32
    %c0_i32_0 = arith.constant 0 : i32
    %c0_i32_1 = arith.constant 0 : i32
    return %c0_i32, %c0_i32_0 : i32, i32
  }
}

module attributes {stable_mosaic.version = 11 : i64} {
  func.func @_bn_lrelu_kernel(%arg0: i32, %arg1: memref<128x8xf32, #tpu.memory_space<vmem>>, %arg2: memref<1x8xf32, #tpu.memory_space<vmem>>, %arg3: memref<1x8xf32, #tpu.memory_space<vmem>>, %arg4: memref<1x8xf32, #tpu.memory_space<vmem>>, %arg5: memref<1x8xf32, #tpu.memory_space<vmem>>, %arg6: memref<128x8xf32, #tpu.memory_space<vmem>>) attributes {dimension_semantics = [#tpu.dimension_semantics<parallel>], iteration_bounds = array<i64: 1>, scalar_prefetch = 0 : i64, scratch_operands = 0 : i64, tpu.core_type = #tpu.core_type<tc>, window_params = [{transform_indices = @transform_0, window_bounds = array<i64: 128, 8>}, {pipeline_mode = #tpu.pipeline_mode<synchronous>, transform_indices = @transform_1, window_bounds = array<i64: 1, 8>}, {pipeline_mode = #tpu.pipeline_mode<synchronous>, transform_indices = @transform_2, window_bounds = array<i64: 1, 8>}, {pipeline_mode = #tpu.pipeline_mode<synchronous>, transform_indices = @transform_3, window_bounds = array<i64: 1, 8>}, {pipeline_mode = #tpu.pipeline_mode<synchronous>, transform_indices = @transform_4, window_bounds = array<i64: 1, 8>}, {transform_indices = @transform_5, window_bounds = array<i64: 128, 8>}]} {
    %c0 = arith.constant 0 : index
    %c0_0 = arith.constant 0 : index
    %0 = vector.load %arg2[%c0, %c0_0] : memref<1x8xf32, #tpu.memory_space<vmem>>, vector<1x8xf32>
    %cst = arith.constant 7.812500e-03 : f32
    %1 = vector.broadcast %cst : f32 to vector<1x8xf32>
    %2 = arith.mulf %0, %1 : vector<1x8xf32>
    %c0_1 = arith.constant 0 : index
    %c0_2 = arith.constant 0 : index
    %3 = vector.load %arg3[%c0_1, %c0_2] : memref<1x8xf32, #tpu.memory_space<vmem>>, vector<1x8xf32>
    %cst_3 = arith.constant 7.812500e-03 : f32
    %4 = vector.broadcast %cst_3 : f32 to vector<1x8xf32>
    %5 = arith.mulf %3, %4 : vector<1x8xf32>
    %6 = arith.mulf %2, %2 : vector<1x8xf32>
    %7 = arith.subf %5, %6 : vector<1x8xf32>
    %cst_4 = arith.constant 0.000000e+00 : f32
    %8 = vector.broadcast %cst_4 : f32 to vector<1x8xf32>
    %9 = arith.maximumf %7, %8 : vector<1x8xf32>
    %c0_5 = arith.constant 0 : index
    %c0_6 = arith.constant 0 : index
    %10 = vector.load %arg4[%c0_5, %c0_6] : memref<1x8xf32, #tpu.memory_space<vmem>>, vector<1x8xf32>
    %cst_7 = arith.constant 9.99999974E-6 : f32
    %11 = vector.broadcast %cst_7 : f32 to vector<1x8xf32>
    %12 = arith.addf %9, %11 : vector<1x8xf32>
    %13 = math.rsqrt %12 : vector<1x8xf32>
    %14 = arith.mulf %10, %13 : vector<1x8xf32>
    %c0_8 = arith.constant 0 : index
    %c0_9 = arith.constant 0 : index
    %15 = vector.load %arg5[%c0_8, %c0_9] : memref<1x8xf32, #tpu.memory_space<vmem>>, vector<1x8xf32>
    %16 = arith.mulf %2, %14 : vector<1x8xf32>
    %17 = arith.subf %15, %16 : vector<1x8xf32>
    %c0_10 = arith.constant 0 : index
    %c0_11 = arith.constant 0 : index
    %18 = vector.load %arg1[%c0_10, %c0_11] : memref<128x8xf32, #tpu.memory_space<vmem>>, vector<128x8xf32>
    %19 = vector.broadcast %14 : vector<1x8xf32> to vector<128x8xf32>
    %20 = arith.mulf %18, %19 : vector<128x8xf32>
    %21 = vector.broadcast %17 : vector<1x8xf32> to vector<128x8xf32>
    %22 = arith.addf %20, %21 : vector<128x8xf32>
    %cst_12 = arith.constant 0.000000e+00 : f32
    %23 = vector.broadcast %cst_12 : f32 to vector<128x8xf32>
    %24 = arith.cmpf oge, %22, %23 : vector<128x8xf32>
    %cst_13 = arith.constant 1.000000e-01 : f32
    %25 = vector.broadcast %cst_13 : f32 to vector<128x8xf32>
    %26 = arith.mulf %25, %22 : vector<128x8xf32>
    %27 = arith.select %24, %22, %26 : vector<128x8xi1>, vector<128x8xf32>
    %c0_14 = arith.constant 0 : index
    %c0_15 = arith.constant 0 : index
    %28 = vector.load %arg6[%c0_14, %c0_15] : memref<128x8xf32, #tpu.memory_space<vmem>>, vector<128x8xf32>
    tpu.vector_store %arg6[%c0_14, %c0_15], %27 {strides = array<i32>} : memref<128x8xf32, #tpu.memory_space<vmem>>, vector<128x8xf32>,
    return
  }
  func.func @transform_0(%arg0: i32) -> (i32, i32) {
    %c0_i32 = arith.constant 0 : i32
    %c0_i32_0 = arith.constant 0 : i32
    return %arg0, %c0_i32 : i32, i32
  }
  func.func @transform_1(%arg0: i32) -> (i32, i32) {
    %c0_i32 = arith.constant 0 : i32
    %c0_i32_0 = arith.constant 0 : i32
    %c0_i32_1 = arith.constant 0 : i32
    return %c0_i32, %c0_i32_0 : i32, i32
  }
  func.func @transform_2(%arg0: i32) -> (i32, i32) {
    %c0_i32 = arith.constant 0 : i32
    %c0_i32_0 = arith.constant 0 : i32
    %c0_i32_1 = arith.constant 0 : i32
    return %c0_i32, %c0_i32_0 : i32, i32
  }
  func.func @transform_3(%arg0: i32) -> (i32, i32) {
    %c0_i32 = arith.constant 0 : i32
    %c0_i32_0 = arith.constant 0 : i32
    %c0_i32_1 = arith.constant 0 : i32
    return %c0_i32, %c0_i32_0 : i32, i32
  }
  func.func @transform_4(%arg0: i32) -> (i32, i32) {
    %c0_i32 = arith.constant 0 : i32
    %c0_i32_0 = arith.constant 0 : i32
    %c0_i32_1 = arith.constant 0 : i32
    return %c0_i32, %c0_i32_0 : i32, i32
  }
  func.func @transform_5(%arg0: i32) -> (i32, i32) {
    %c0_i32 = arith.constant 0 : i32
    %c0_i32_0 = arith.constant 0 : i32
    return %arg0, %c0_i32 : i32, i32
  }
}

module attributes {stable_mosaic.version = 11 : i64} {
  func.func @_bn_lrelu_add_kernel(%arg0: i32, %arg1: memref<128x8xf32, #tpu.memory_space<vmem>>, %arg2: memref<1x8xf32, #tpu.memory_space<vmem>>, %arg3: memref<1x8xf32, #tpu.memory_space<vmem>>, %arg4: memref<1x8xf32, #tpu.memory_space<vmem>>, %arg5: memref<1x8xf32, #tpu.memory_space<vmem>>, %arg6: memref<128x8xf32, #tpu.memory_space<vmem>>, %arg7: memref<128x8xf32, #tpu.memory_space<vmem>>) attributes {dimension_semantics = [#tpu.dimension_semantics<parallel>], iteration_bounds = array<i64: 1>, scalar_prefetch = 0 : i64, scratch_operands = 0 : i64, tpu.core_type = #tpu.core_type<tc>, window_params = [{transform_indices = @transform_0, window_bounds = array<i64: 128, 8>}, {pipeline_mode = #tpu.pipeline_mode<synchronous>, transform_indices = @transform_1, window_bounds = array<i64: 1, 8>}, {pipeline_mode = #tpu.pipeline_mode<synchronous>, transform_indices = @transform_2, window_bounds = array<i64: 1, 8>}, {pipeline_mode = #tpu.pipeline_mode<synchronous>, transform_indices = @transform_3, window_bounds = array<i64: 1, 8>}, {pipeline_mode = #tpu.pipeline_mode<synchronous>, transform_indices = @transform_4, window_bounds = array<i64: 1, 8>}, {transform_indices = @transform_5, window_bounds = array<i64: 128, 8>}, {transform_indices = @transform_6, window_bounds = array<i64: 128, 8>}]} {
    %c0 = arith.constant 0 : index
    %c0_0 = arith.constant 0 : index
    %0 = vector.load %arg2[%c0, %c0_0] : memref<1x8xf32, #tpu.memory_space<vmem>>, vector<1x8xf32>
    %cst = arith.constant 7.812500e-03 : f32
    %1 = vector.broadcast %cst : f32 to vector<1x8xf32>
    %2 = arith.mulf %0, %1 : vector<1x8xf32>
    %c0_1 = arith.constant 0 : index
    %c0_2 = arith.constant 0 : index
    %3 = vector.load %arg3[%c0_1, %c0_2] : memref<1x8xf32, #tpu.memory_space<vmem>>, vector<1x8xf32>
    %cst_3 = arith.constant 7.812500e-03 : f32
    %4 = vector.broadcast %cst_3 : f32 to vector<1x8xf32>
    %5 = arith.mulf %3, %4 : vector<1x8xf32>
    %6 = arith.mulf %2, %2 : vector<1x8xf32>
    %7 = arith.subf %5, %6 : vector<1x8xf32>
    %cst_4 = arith.constant 0.000000e+00 : f32
    %8 = vector.broadcast %cst_4 : f32 to vector<1x8xf32>
    %9 = arith.maximumf %7, %8 : vector<1x8xf32>
    %c0_5 = arith.constant 0 : index
    %c0_6 = arith.constant 0 : index
    %10 = vector.load %arg4[%c0_5, %c0_6] : memref<1x8xf32, #tpu.memory_space<vmem>>, vector<1x8xf32>
    %cst_7 = arith.constant 9.99999974E-6 : f32
    %11 = vector.broadcast %cst_7 : f32 to vector<1x8xf32>
    %12 = arith.addf %9, %11 : vector<1x8xf32>
    %13 = math.rsqrt %12 : vector<1x8xf32>
    %14 = arith.mulf %10, %13 : vector<1x8xf32>
    %c0_8 = arith.constant 0 : index
    %c0_9 = arith.constant 0 : index
    %15 = vector.load %arg5[%c0_8, %c0_9] : memref<1x8xf32, #tpu.memory_space<vmem>>, vector<1x8xf32>
    %16 = arith.mulf %2, %14 : vector<1x8xf32>
    %17 = arith.subf %15, %16 : vector<1x8xf32>
    %c0_10 = arith.constant 0 : index
    %c0_11 = arith.constant 0 : index
    %18 = vector.load %arg1[%c0_10, %c0_11] : memref<128x8xf32, #tpu.memory_space<vmem>>, vector<128x8xf32>
    %19 = vector.broadcast %14 : vector<1x8xf32> to vector<128x8xf32>
    %20 = arith.mulf %18, %19 : vector<128x8xf32>
    %21 = vector.broadcast %17 : vector<1x8xf32> to vector<128x8xf32>
    %22 = arith.addf %20, %21 : vector<128x8xf32>
    %cst_12 = arith.constant 0.000000e+00 : f32
    %23 = vector.broadcast %cst_12 : f32 to vector<128x8xf32>
    %24 = arith.cmpf oge, %22, %23 : vector<128x8xf32>
    %cst_13 = arith.constant 1.000000e-01 : f32
    %25 = vector.broadcast %cst_13 : f32 to vector<128x8xf32>
    %26 = arith.mulf %25, %22 : vector<128x8xf32>
    %27 = arith.select %24, %22, %26 : vector<128x8xi1>, vector<128x8xf32>
    %c0_14 = arith.constant 0 : index
    %c0_15 = arith.constant 0 : index
    %28 = vector.load %arg6[%c0_14, %c0_15] : memref<128x8xf32, #tpu.memory_space<vmem>>, vector<128x8xf32>
    %29 = arith.addf %27, %28 : vector<128x8xf32>
    %c0_16 = arith.constant 0 : index
    %c0_17 = arith.constant 0 : index
    %30 = vector.load %arg7[%c0_16, %c0_17] : memref<128x8xf32, #tpu.memory_space<vmem>>, vector<128x8xf32>
    tpu.vector_store %arg7[%c0_16, %c0_17], %29 {strides = array<i32>} : memref<128x8xf32, #tpu.memory_space<vmem>>, vector<128x8xf32>,
    return
  }
  func.func @transform_0(%arg0: i32) -> (i32, i32) {
    %c0_i32 = arith.constant 0 : i32
    %c0_i32_0 = arith.constant 0 : i32
    return %arg0, %c0_i32 : i32, i32
  }
  func.func @transform_1(%arg0: i32) -> (i32, i32) {
    %c0_i32 = arith.constant 0 : i32
    %c0_i32_0 = arith.constant 0 : i32
    %c0_i32_1 = arith.constant 0 : i32
    return %c0_i32, %c0_i32_0 : i32, i32
  }
  func.func @transform_2(%arg0: i32) -> (i32, i32) {
    %c0_i32 = arith.constant 0 : i32
    %c0_i32_0 = arith.constant 0 : i32
    %c0_i32_1 = arith.constant 0 : i32
    return %c0_i32, %c0_i32_0 : i32, i32
  }
  func.func @transform_3(%arg0: i32) -> (i32, i32) {
    %c0_i32 = arith.constant 0 : i32
    %c0_i32_0 = arith.constant 0 : i32
    %c0_i32_1 = arith.constant 0 : i32
    return %c0_i32, %c0_i32_0 : i32, i32
  }
  func.func @transform_4(%arg0: i32) -> (i32, i32) {
    %c0_i32 = arith.constant 0 : i32
    %c0_i32_0 = arith.constant 0 : i32
    %c0_i32_1 = arith.constant 0 : i32
    return %c0_i32, %c0_i32_0 : i32, i32
  }
  func.func @transform_5(%arg0: i32) -> (i32, i32) {
    %c0_i32 = arith.constant 0 : i32
    %c0_i32_0 = arith.constant 0 : i32
    return %arg0, %c0_i32 : i32, i32
  }
  func.func @transform_6(%arg0: i32) -> (i32, i32) {
    %c0_i32 = arith.constant 0 : i32
    %c0_i32_0 = arith.constant 0 : i32
    return %arg0, %c0_i32 : i32, i32
  }
}

module attributes {stable_mosaic.version = 11 : i64} {
  func.func @_conv_stats_kernel(%arg0: i32, %arg1: memref<128x72xbf16, #tpu.memory_space<vmem>>, %arg2: memref<72x8xbf16, #tpu.memory_space<vmem>>, %arg3: memref<1x8xf32, #tpu.memory_space<vmem>>, %arg4: memref<128x8xf32, #tpu.memory_space<vmem>>, %arg5: memref<1x8xf32, #tpu.memory_space<vmem>>, %arg6: memref<1x8xf32, #tpu.memory_space<vmem>>) attributes {dimension_semantics = [#tpu.dimension_semantics<arbitrary>], iteration_bounds = array<i64: 1>, scalar_prefetch = 0 : i64, scratch_operands = 0 : i64, tpu.core_type = #tpu.core_type<tc>, window_params = [{transform_indices = @transform_0, window_bounds = array<i64: 128, 72>}, {pipeline_mode = #tpu.pipeline_mode<synchronous>, transform_indices = @transform_1, window_bounds = array<i64: 72, 8>}, {pipeline_mode = #tpu.pipeline_mode<synchronous>, transform_indices = @transform_2, window_bounds = array<i64: 1, 8>}, {transform_indices = @transform_3, window_bounds = array<i64: 128, 8>}, {pipeline_mode = #tpu.pipeline_mode<synchronous>, transform_indices = @transform_4, window_bounds = array<i64: 1, 8>}, {pipeline_mode = #tpu.pipeline_mode<synchronous>, transform_indices = @transform_5, window_bounds = array<i64: 1, 8>}]} {
    %c0 = arith.constant 0 : index
    %c0_0 = arith.constant 0 : index
    %0 = vector.load %arg1[%c0, %c0_0] : memref<128x72xbf16, #tpu.memory_space<vmem>>, vector<128x72xbf16>
    %c0_1 = arith.constant 0 : index
    %c0_2 = arith.constant 0 : index
    %1 = vector.load %arg2[%c0_1, %c0_2] : memref<72x8xbf16, #tpu.memory_space<vmem>>, vector<72x8xbf16>
    %cst = arith.constant dense<0.000000e+00> : vector<128x8xf32>
    %2 = tpu.matmul %0, %1, %cst {dimension_numbers = #tpu.dot_dimension_numbers<[1], [0], [0], [1], [0, 0, 1, 1], [], []>} : vector<128x72xbf16>, vector<72x8xbf16>, vector<128x8xf32> -> vector<128x8xf32>
    %c0_3 = arith.constant 0 : index
    %c0_4 = arith.constant 0 : index
    %3 = vector.load %arg3[%c0_3, %c0_4] : memref<1x8xf32, #tpu.memory_space<vmem>>, vector<1x8xf32>
    %4 = vector.broadcast %3 : vector<1x8xf32> to vector<128x8xf32>
    %5 = arith.addf %2, %4 : vector<128x8xf32>
    %c0_5 = arith.constant 0 : index
    %c0_6 = arith.constant 0 : index
    %6 = vector.load %arg4[%c0_5, %c0_6] : memref<128x8xf32, #tpu.memory_space<vmem>>, vector<128x8xf32>
    tpu.vector_store %arg4[%c0_5, %c0_6], %5 {strides = array<i32>} : memref<128x8xf32, #tpu.memory_space<vmem>>, vector<128x8xf32>,
    %c128_i32 = arith.constant 128 : i32
    %7 = arith.muli %arg0, %c128_i32 : i32
    %8 = tpu.iota {dimensions = array<i32: 0>} : vector<128x1xi32>
    %9 = vector.broadcast %7 : i32 to vector<128x1xi32>
    %10 = arith.addi %9, %8 : vector<128x1xi32>
    %c128_i32_7 = arith.constant 128 : i32
    %11 = vector.broadcast %c128_i32_7 : i32 to vector<128x1xi32>
    %12 = arith.cmpi slt, %10, %11 : vector<128x1xi32>
    %cst_8 = arith.constant 0.000000e+00 : f32
    %13 = vector.shape_cast %12 : vector<128x1xi1> to vector<128x1xi1>
    %14 = vector.broadcast %13 : vector<128x1xi1> to vector<128x8xi1>
    %15 = vector.broadcast %cst_8 : f32 to vector<128x8xf32>
    %16 = arith.select %14, %5, %15 : vector<128x8xi1>, vector<128x8xf32>
    %c0_i32 = arith.constant 0 : i32
    %17 = arith.cmpi eq, %arg0, %c0_i32 : i32
    %18 = arith.extui %17 : i1 to i32
    %c0_i32_9 = arith.constant 0 : i32
    %19 = arith.cmpi ne, %18, %c0_i32_9 : i32
    scf.if %19 {
      %cst_20 = arith.constant 0.000000e+00 : f32
      %31 = vector.broadcast %cst_20 : f32 to vector<1x8xf32>
      %c0_21 = arith.constant 0 : index
      %c0_22 = arith.constant 0 : index
      %32 = vector.load %arg5[%c0_21, %c0_22] : memref<1x8xf32, #tpu.memory_space<vmem>>, vector<1x8xf32>
      tpu.vector_store %arg5[%c0_21, %c0_22], %31 {strides = array<i32>} : memref<1x8xf32, #tpu.memory_space<vmem>>, vector<1x8xf32>,
      %cst_23 = arith.constant 0.000000e+00 : f32
      %33 = vector.broadcast %cst_23 : f32 to vector<1x8xf32>
      %c0_24 = arith.constant 0 : index
      %c0_25 = arith.constant 0 : index
      %34 = vector.load %arg6[%c0_24, %c0_25] : memref<1x8xf32, #tpu.memory_space<vmem>>, vector<1x8xf32>
      tpu.vector_store %arg6[%c0_24, %c0_25], %33 {strides = array<i32>} : memref<1x8xf32, #tpu.memory_space<vmem>>, vector<1x8xf32>,
    } else {
    }
    %c0_10 = arith.constant 0 : index
    %c0_11 = arith.constant 0 : index
    %20 = vector.load %arg5[%c0_10, %c0_11] : memref<1x8xf32, #tpu.memory_space<vmem>>, vector<1x8xf32>
    %cst_12 = arith.constant dense<0.000000e+00> : vector<8xf32>
    %21 = vector.multi_reduction <add>, %16, %cst_12 [0] : vector<128x8xf32> to vector<8xf32>
    %22 = vector.shape_cast %21 : vector<8xf32> to vector<1x8xf32>
    %23 = arith.addf %20, %22 : vector<1x8xf32>
    %c0_13 = arith.constant 0 : index
    %c0_14 = arith.constant 0 : index
    %24 = vector.load %arg5[%c0_13, %c0_14] : memref<1x8xf32, #tpu.memory_space<vmem>>, vector<1x8xf32>
    tpu.vector_store %arg5[%c0_13, %c0_14], %23 {strides = array<i32>} : memref<1x8xf32, #tpu.memory_space<vmem>>, vector<1x8xf32>,
    %c0_15 = arith.constant 0 : index
    %c0_16 = arith.constant 0 : index
    %25 = vector.load %arg6[%c0_15, %c0_16] : memref<1x8xf32, #tpu.memory_space<vmem>>, vector<1x8xf32>
    %26 = arith.mulf %16, %16 : vector<128x8xf32>
    %cst_17 = arith.constant dense<0.000000e+00> : vector<8xf32>
    %27 = vector.multi_reduction <add>, %26, %cst_17 [0] : vector<128x8xf32> to vector<8xf32>
    %28 = vector.shape_cast %27 : vector<8xf32> to vector<1x8xf32>
    %29 = arith.addf %25, %28 : vector<1x8xf32>
    %c0_18 = arith.constant 0 : index
    %c0_19 = arith.constant 0 : index
    %30 = vector.load %arg6[%c0_18, %c0_19] : memref<1x8xf32, #tpu.memory_space<vmem>>, vector<1x8xf32>
    tpu.vector_store %arg6[%c0_18, %c0_19], %29 {strides = array<i32>} : memref<1x8xf32, #tpu.memory_space<vmem>>, vector<1x8xf32>,
    return
  }
  func.func @transform_0(%arg0: i32) -> (i32, i32) {
    %c0_i32 = arith.constant 0 : i32
    %c0_i32_0 = arith.constant 0 : i32
    return %arg0, %c0_i32 : i32, i32
  }
  func.func @transform_1(%arg0: i32) -> (i32, i32) {
    %c0_i32 = arith.constant 0 : i32
    %c0_i32_0 = arith.constant 0 : i32
    %c0_i32_1 = arith.constant 0 : i32
    return %c0_i32, %c0_i32_0 : i32, i32
  }
  func.func @transform_2(%arg0: i32) -> (i32, i32) {
    %c0_i32 = arith.constant 0 : i32
    %c0_i32_0 = arith.constant 0 : i32
    %c0_i32_1 = arith.constant 0 : i32
    return %c0_i32, %c0_i32_0 : i32, i32
  }
  func.func @transform_3(%arg0: i32) -> (i32, i32) {
    %c0_i32 = arith.constant 0 : i32
    %c0_i32_0 = arith.constant 0 : i32
    return %arg0, %c0_i32 : i32, i32
  }
  func.func @transform_4(%arg0: i32) -> (i32, i32) {
    %c0_i32 = arith.constant 0 : i32
    %c0_i32_0 = arith.constant 0 : i32
    %c0_i32_1 = arith.constant 0 : i32
    return %c0_i32, %c0_i32_0 : i32, i32
  }
  func.func @transform_5(%arg0: i32) -> (i32, i32) {
    %c0_i32 = arith.constant 0 : i32
    %c0_i32_0 = arith.constant 0 : i32
    %c0_i32_1 = arith.constant 0 : i32
    return %c0_i32, %c0_i32_0 : i32, i32
  }
}

</mosaic_0001>

<llo_original>
// kernel: downsample_forward.7
$region0: #{downsample_forward.7}
  #allocation0 [shape = 'u32[]', space=smem, size = 0x4, offset = 0x4, fixed_abs, tag = 'smem constant byte address 0x4 - core index']
  #allocation1 [shape = 'u32[144,128]{1,0:T(1,128)}', space=vmem, size = 0x12000, scoped, tag = 'internal scratch']
  %s0 = inlined_call_operand.vmem [shape: f32[128,8], index: 0, kind: input, shape index: {}]
  %s1 = inlined_call_operand.vmem [shape: f32[1,8], index: 1, kind: input, shape index: {}]
  %s2 = inlined_call_operand.vmem [shape: f32[1,8], index: 2, kind: input, shape index: {}]
  %s3 = inlined_call_operand.vmem [shape: f32[1,8], index: 3, kind: input, shape index: {}]
  %s4 = inlined_call_operand.vmem [shape: f32[1,8], index: 4, kind: input, shape index: {}]
  %s5 = inlined_call_operand.vmem [shape: f32[128,8], index: 5, kind: output, shape index: {}]
  %s6 = sld [smem:[#allocation0]]
  $region30: #{downsample_forward.7} parent=0
    _
  %s8 = ssub.s32 1, %s6
  %s9 = scalar_select 0, %s8, %s6
  // Predicated region
  $region2: #{downsample_forward.7} parent=0 // pred_check
    _
  $region3: #{downsample_forward.7} parent=0 // pred_check_branch
    %11 = sbr.rel (0) target = $region5
  $region4: #{downsample_forward.7} parent=0 // pred_region
    _
  $region5: #{downsample_forward.7} parent=0 // pred_fallthru
    _
  // Predicated region
  $region6: #{downsample_forward.7} parent=0 // pred_check
    _
  $region7: #{downsample_forward.7} parent=0 // pred_check_branch
    %13 = sbr.rel (0) target = $region9
  $region8: #{downsample_forward.7} parent=0 // pred_region
    _
  $region9: #{downsample_forward.7} parent=0 // pred_fallthru
    _
  // Predicated region
  $region10: #{downsample_forward.7} parent=0 // pred_check
    _
  $region11: #{downsample_forward.7} parent=0 // pred_check_branch
    %15 = sbr.rel (0) target = $region13
  $region12: #{downsample_forward.7} parent=0 // pred_region
    _
  $region13: #{downsample_forward.7} parent=0 // pred_fallthru
    _
  // Predicated region
  $region14: #{downsample_forward.7} parent=0 // pred_check
    _
  $region15: #{downsample_forward.7} parent=0 // pred_check_branch
    %17 = sbr.rel (0) target = $region17
  $region16: #{downsample_forward.7} parent=0 // pred_region
    _
  $region17: #{downsample_forward.7} parent=0 // pred_fallthru
    _
  // Predicated region
  $region18: #{downsample_forward.7} parent=0 // pred_check
    _
  $region19: #{downsample_forward.7} parent=0 // pred_check_branch
    %19 = sbr.rel (0) target = $region21
  $region20: #{downsample_forward.7} parent=0 // pred_region
    _
  $region21: #{downsample_forward.7} parent=0 // pred_fallthru
    _
  %v20 = vld [vmem:[%s1] sm:$0x1]
  %v21 = vmul.f32 %v20, 0.0078125
  %v22 = vld [vmem:[%s2] sm:$0x1]
  %v23 = vmul.f32 %v22, 0.0078125
  %v24 = vmul.f32 %v21, %v21
  %v25 = vsub.f32 %v23, %v24
  %v26 = vmax.f32 %v25, 0.0
  %v27 = vld [vmem:[%s3] sm:$0x1]
  %v28 = vadd.f32 %v26, 1e-05
  %v29 = vrsqrt.pop %v28
  %v30 = vmul.f32 %v27, %v29
  %v31 = vld [vmem:[%s4] sm:$0x1]
  %v32 = vmul.f32 %v21, %v30
  %v33 = vsub.f32 %v31, %v32
  %v34 = vld [vmem:[%s0] sm:$0xff]
  %v35 = vld [vmem:[%s0 + $0x8] sm:$0xff]
  %v36 = vld [vmem:[%s0 + $0x10] sm:$0xff]
  %v37 = vld [vmem:[%s0 + $0x18] sm:$0xff]
  %v38 = vld [vmem:[%s0 + $0x20] sm:$0xff]
  %v39 = vld [vmem:[%s0 + $0x28] sm:$0xff]
  %v40 = vld [vmem:[%s0 + $0x30] sm:$0xff]
  %v41 = vld [vmem:[%s0 + $0x38] sm:$0xff]
  %v42 = vld [vmem:[%s0 + $0x40] sm:$0xff]
  %v43 = vld [vmem:[%s0 + $0x48] sm:$0xff]
  %v44 = vld [vmem:[%s0 + $0x50] sm:$0xff]
  %v45 = vld [vmem:[%s0 + $0x58] sm:$0xff]
  %v46 = vld [vmem:[%s0 + $0x60] sm:$0xff]
  %v47 = vld [vmem:[%s0 + $0x68] sm:$0xff]
  %v48 = vld [vmem:[%s0 + $0x70] sm:$0xff]
  %v49 = vld [vmem:[%s0 + $0x78] sm:$0xff]
  %v51 = vlaneseq
  %v52 = vshrl.u32 %v51, 7
  %v53 = vsub.s32 0, %v52
  %v54 = vrot.slane %v30, %v53
  %v56 = vmul.f32 %v34, %v54
  %v57 = vmul.f32 %v35, %v54
  %v58 = vmul.f32 %v36, %v54
  %v59 = vmul.f32 %v37, %v54
  %v60 = vmul.f32 %v38, %v54
  %v61 = vmul.f32 %v39, %v54
  %v62 = vmul.f32 %v40, %v54
  %v63 = vmul.f32 %v41, %v54
  %v64 = vmul.f32 %v42, %v54
  %v65 = vmul.f32 %v43, %v54
  %v66 = vmul.f32 %v44, %v54
  %v67 = vmul.f32 %v45, %v54
  %v68 = vmul.f32 %v46, %v54
  %v69 = vmul.f32 %v47, %v54
  %v70 = vmul.f32 %v48, %v54
  %v71 = vmul.f32 %v49, %v54
  %v73 = vlaneseq
  %v74 = vshrl.u32 %v73, 7
  %v75 = vsub.s32 0, %v74
  %v76 = vrot.slane %v33, %v75
  %v78 = vadd.f32 %v56, %v76
  %v79 = vadd.f32 %v57, %v76
  %v80 = vadd.f32 %v58, %v76
  %v81 = vadd.f32 %v59, %v76
  %v82 = vadd.f32 %v60, %v76
  %v83 = vadd.f32 %v61, %v76
  %v84 = vadd.f32 %v62, %v76
  %v85 = vadd.f32 %v63, %v76
  %v86 = vadd.f32 %v64, %v76
  %v87 = vadd.f32 %v65, %v76
  %v88 = vadd.f32 %v66, %v76
  %v89 = vadd.f32 %v67, %v76
  %v90 = vadd.f32 %v68, %v76
  %v91 = vadd.f32 %v69, %v76
  %v92 = vadd.f32 %v70, %v76
  %v93 = vadd.f32 %v71, %v76
  %vm94 = vcmp.ge.f32.partialorder %v78, 0.0
  %vm95 = vcmp.ge.f32.partialorder %v79, 0.0
  %vm96 = vcmp.ge.f32.partialorder %v80, 0.0
  %vm97 = vcmp.ge.f32.partialorder %v81, 0.0
  %vm98 = vcmp.ge.f32.partialorder %v82, 0.0
  %vm99 = vcmp.ge.f32.partialorder %v83, 0.0
  %vm100 = vcmp.ge.f32.partialorder %v84, 0.0
  %vm101 = vcmp.ge.f32.partialorder %v85, 0.0
  %vm102 = vcmp.ge.f32.partialorder %v86, 0.0
  %vm103 = vcmp.ge.f32.partialorder %v87, 0.0
  %vm104 = vcmp.ge.f32.partialorder %v88, 0.0
  %vm105 = vcmp.ge.f32.partialorder %v89, 0.0
  %vm106 = vcmp.ge.f32.partialorder %v90, 0.0
  %vm107 = vcmp.ge.f32.partialorder %v91, 0.0
  %vm108 = vcmp.ge.f32.partialorder %v92, 0.0
  %vm109 = vcmp.ge.f32.partialorder %v93, 0.0
  %v110 = vmul.f32 %v78, 0.1
  %v111 = vmul.f32 %v79, 0.1
  %v112 = vmul.f32 %v80, 0.1
  %v113 = vmul.f32 %v81, 0.1
  %v114 = vmul.f32 %v82, 0.1
  %v115 = vmul.f32 %v83, 0.1
  %v116 = vmul.f32 %v84, 0.1
  %v117 = vmul.f32 %v85, 0.1
  %v118 = vmul.f32 %v86, 0.1
  %v119 = vmul.f32 %v87, 0.1
  %v120 = vmul.f32 %v88, 0.1
  %v121 = vmul.f32 %v89, 0.1
  %v122 = vmul.f32 %v90, 0.1
  %v123 = vmul.f32 %v91, 0.1
  %v124 = vmul.f32 %v92, 0.1
  %v125 = vmul.f32 %v93, 0.1
  %v126 = vsel %vm94, %v78, %v110
  %v127 = vsel %vm95, %v79, %v111
  %v128 = vsel %vm96, %v80, %v112
  %v129 = vsel %vm97, %v81, %v113
  %v130 = vsel %vm98, %v82, %v114
  %v131 = vsel %vm99, %v83, %v115
  %v132 = vsel %vm100, %v84, %v116
  %v133 = vsel %vm101, %v85, %v117
  %v134 = vsel %vm102, %v86, %v118
  %v135 = vsel %vm103, %v87, %v119
  %v136 = vsel %vm104, %v88, %v120
  %v137 = vsel %vm105, %v89, %v121
  %v138 = vsel %vm106, %v90, %v122
  %v139 = vsel %vm107, %v91, %v123
  %v140 = vsel %vm108, %v92, %v124
  %v141 = vsel %vm109, %v93, %v125
  %vm142 = vcmask 64512
  %143 = vst.msk [vmem:[%s5] sm:$0xff] %vm142, %v126
  %144 = vst.msk [vmem:[%s5 + $0x8] sm:$0xff] %vm142, %v127
  %145 = vst.msk [vmem:[%s5 + $0x10] sm:$0xff] %vm142, %v128
  %146 = vst.msk [vmem:[%s5 + $0x18] sm:$0xff] %vm142, %v129
  %147 = vst.msk [vmem:[%s5 + $0x20] sm:$0xff] %vm142, %v130
  %148 = vst.msk [vmem:[%s5 + $0x28] sm:$0xff] %vm142, %v131
  %149 = vst.msk [vmem:[%s5 + $0x30] sm:$0xff] %vm142, %v132
  %150 = vst.msk [vmem:[%s5 + $0x38] sm:$0xff] %vm142, %v133
  %151 = vst.msk [vmem:[%s5 + $0x40] sm:$0xff] %vm142, %v134
  %152 = vst.msk [vmem:[%s5 + $0x48] sm:$0xff] %vm142, %v135
  %153 = vst.msk [vmem:[%s5 + $0x50] sm:$0xff] %vm142, %v136
  %154 = vst.msk [vmem:[%s5 + $0x58] sm:$0xff] %vm142, %v137
  %155 = vst.msk [vmem:[%s5 + $0x60] sm:$0xff] %vm142, %v138
  %156 = vst.msk [vmem:[%s5 + $0x68] sm:$0xff] %vm142, %v139
  %157 = vst.msk [vmem:[%s5 + $0x70] sm:$0xff] %vm142, %v140
  %158 = vst.msk [vmem:[%s5 + $0x78] sm:$0xff] %vm142, %v141
  // Predicated region
  $region22: #{downsample_forward.7} parent=0 // pred_check
    _
  $region23: #{downsample_forward.7} parent=0 // pred_check_branch
    %160 = sbr.rel (0) target = $region25
  $region24: #{downsample_forward.7} parent=0 // pred_region
    _
  $region25: #{downsample_forward.7} parent=0 // pred_fallthru
    _
  // Predicated region
  $region26: #{downsample_forward.7} parent=0 // pred_check
    _
  $region27: #{downsample_forward.7} parent=0 // pred_check_branch
    %162 = sbr.rel (0) target = $region29
  $region28: #{downsample_forward.7} parent=0 // pred_region
    _
  $region29: #{downsample_forward.7} parent=0 // pred_fallthru
    _

// kernel: downsample_forward.6
$region0: #{downsample_forward.6}
  #allocation0 [shape = 'u32[]', space=smem, size = 0x4, offset = 0x4, fixed_abs, tag = 'smem constant byte address 0x4 - core index']
  #allocation1 [shape = 'u32[144,128]{1,0:T(1,128)}', space=vmem, size = 0x12000, scoped, tag = 'internal scratch']
  %s0 = inlined_call_operand.vmem [shape: bf16[128,36], index: 0, kind: input, shape index: {}]
  %s1 = inlined_call_operand.vmem [shape: bf16[36,8], index: 1, kind: input, shape index: {}]
  %s2 = inlined_call_operand.vmem [shape: f32[1,8], index: 2, kind: input, shape index: {}]
  %s3 = inlined_call_operand.vmem [shape: bf16[4,8], index: 3, kind: input, shape index: {}]
  %s4 = inlined_call_operand.vmem [shape: f32[1,8], index: 4, kind: input, shape index: {}]
  %s5 = inlined_call_operand.vmem [shape: f32[128,8], index: 5, kind: output, shape index: {0}]
  %s6 = inlined_call_operand.vmem [shape: f32[128,8], index: 6, kind: output, shape index: {1}]
  %s7 = inlined_call_operand.vmem [shape: f32[1,8], index: 7, kind: output, shape index: {2}]
  %s8 = inlined_call_operand.vmem [shape: f32[1,8], index: 8, kind: output, shape index: {3}]
  %9 = xla_tuple %s5, %s6, %s7, %s8
  %s10 = sld [smem:[#allocation0]]
  $region58: #{downsample_forward.6} parent=0
    _
  %s12 = ssub.s32 1, %s10
  %s13 = scalar_select 0, %s12, %s10
  // Predicated region
  $region2: #{downsample_forward.6} parent=0 // pred_check
    _
  $region3: #{downsample_forward.6} parent=0 // pred_check_branch
    %15 = sbr.rel (0) target = $region5
  $region4: #{downsample_forward.6} parent=0 // pred_region
    _
  $region5: #{downsample_forward.6} parent=0 // pred_fallthru
    _
  // Predicated region
  $region6: #{downsample_forward.6} parent=0 // pred_check
    _
  $region7: #{downsample_forward.6} parent=0 // pred_check_branch
    %17 = sbr.rel (0) target = $region9
  $region8: #{downsample_forward.6} parent=0 // pred_region
    _
  $region9: #{downsample_forward.6} parent=0 // pred_fallthru
    _
  // Predicated region
  $region10: #{downsample_forward.6} parent=0 // pred_check
    _
  $region11: #{downsample_forward.6} parent=0 // pred_check_branch
    %19 = sbr.rel (0) target = $region13
  $region12: #{downsample_forward.6} parent=0 // pred_region
    _
  $region13: #{downsample_forward.6} parent=0 // pred_fallthru
    _
  // Predicated region
  $region14: #{downsample_forward.6} parent=0 // pred_check
    _
  $region15: #{downsample_forward.6} parent=0 // pred_check_branch
    %21 = sbr.rel (0) target = $region17
  $region16: #{downsample_forward.6} parent=0 // pred_region
    _
  $region17: #{downsample_forward.6} parent=0 // pred_fallthru
    _
  // Predicated region
  $region18: #{downsample_forward.6} parent=0 // pred_check
    _
  $region19: #{downsample_forward.6} parent=0 // pred_check_branch
    %23 = sbr.rel (0) target = $region21
  $region20: #{downsample_forward.6} parent=0 // pred_region
    _
  $region21: #{downsample_forward.6} parent=0 // pred_fallthru
    _
  %v25 = vld [vmem:[%s0] sm:$0xf]
  %v26 = vld [vmem:[%s0 + $0x4] sm:$0xf]
  %v27 = vld [vmem:[%s0 + $0x8] sm:$0xf]
  %v28 = vld [vmem:[%s0 + $0xc] sm:$0xf]
  %v29 = vld [vmem:[%s0 + $0x10] sm:$0xf]
  %v30 = vld [vmem:[%s0 + $0x14] sm:$0xf]
  %v31 = vld [vmem:[%s0 + $0x18] sm:$0xf]
  %v32 = vld [vmem:[%s0 + $0x1c] sm:$0xf]
  %v33 = vld [vmem:[%s0 + $0x20] sm:$0xf]
  %v34 = vld [vmem:[%s0 + $0x24] sm:$0xf]
  %v35 = vld [vmem:[%s0 + $0x28] sm:$0xf]
  %v36 = vld [vmem:[%s0 + $0x2c] sm:$0xf]
  %v37 = vld [vmem:[%s0 + $0x30] sm:$0xf]
  %v38 = vld [vmem:[%s0 + $0x34] sm:$0xf]
  %v39 = vld [vmem:[%s0 + $0x38] sm:$0xf]
  %v40 = vld [vmem:[%s0 + $0x3c] sm:$0xf]
  %v41 = vld [vmem:[%s1] sm:$0xf]
  %v42 = vld [vmem:[%s1 + $0x4] sm:$0xf]
  %v43 = vld [vmem:[%s1 + $0x8] sm:$0xf]
  %v44 = vld [vmem:[%s1 + $0xc] sm:$0xf]
  %v45 = vld [vmem:[%s1 + $0x10] sm:$0x3]
  %v46 = vld [vmem:[%s2] sm:$0x1]
  %v48 = vlaneseq
  %v49 = vshrl.u32 %v48, 7
  %v50 = vsub.s32 0, %v49
  %v51 = vrot.slane %v46, %v50
  %v69 = vunpack.c.l.b16 %v25
  %v70 = vunpack.c.l.b16 %v26
  %v71 = vunpack.c.l.b16 %v27
  %v72 = vunpack.c.l.b16 %v28
  %v73 = vunpack.c.l.b16 %v29
  %v74 = vunpack.c.l.b16 %v30
  %v75 = vunpack.c.l.b16 %v31
  %v76 = vunpack.c.l.b16 %v32
  %v77 = vunpack.c.l.b16 %v33
  %v78 = vunpack.c.l.b16 %v34
  %v79 = vunpack.c.l.b16 %v35
  %v80 = vunpack.c.l.b16 %v36
  %v81 = vunpack.c.l.b16 %v37
  %v82 = vunpack.c.l.b16 %v38
  %v83 = vunpack.c.l.b16 %v39
  %v84 = vunpack.c.l.b16 %v40
  %v85 = vpack.c.b16 %v70, %v69
  %v86 = vpack.c.b16 %v72, %v71
  %v87 = vpack.c.b16 %v74, %v73
  %v88 = vpack.c.b16 %v76, %v75
  %v89 = vpack.c.b16 %v78, %v77
  %v90 = vpack.c.b16 %v80, %v79
  %v91 = vpack.c.b16 %v82, %v81
  %v92 = vpack.c.b16 %v84, %v83
  %v98 = vunpack.c.l.b16 %v41
  %v99 = vunpack.c.l.b16 %v42
  %v100 = vunpack.c.l.b16 %v43
  %v101 = vunpack.c.l.b16 %v44
  %v102 = vunpack.c.l.b16 %v45
  %v103 = vpack.c.b16 %v99, %v98
  %v104 = vpack.c.b16 %v101, %v100
  %v105 = vpack.c.b16 %v102, %v102
  %vm108 = vcmask 293888
  %v110 = vsel %vm108, %v85, 0
  %v113 = vsel %vm108, %v86, 0
  %v116 = vsel %vm108, %v87, 0
  %v119 = vsel %vm108, %v88, 0
  %v122 = vsel %vm108, %v89, 0
  %v125 = vsel %vm108, %v90, 0
  %v128 = vsel %vm108, %v91, 0
  %v131 = vsel %vm108, %v92, 0
  %vm133 = vcmask 1041408
  %v135 = vsel %vm133, %v105, 0
  %137 = vmatprep.subr.bf16.mxu0 0
  %138 = vmatpush1.bf16.msra.mxu0 %v103
  %139 = vmatprep.subr.bf16.mxu0 0
  %140 = vmatpush1.bf16.msra.mxu0 %v104
  %141 = vmatprep.subr.bf16.mxu0 0
  %142 = vmatpush1.bf16.msra.mxu0 %v135
  %143 = vmatprep.subr.bf16.mxu0 0
  %144 = vmatpush1.bf16.msra.mxu0 0
  %145 = vmatprep.subr.bf16.mxu0 0
  %146 = vmatpush1.bf16.msra.mxu0 0
  %147 = vmatprep.subr.bf16.mxu0 0
  %148 = vmatpush1.bf16.msra.mxu0 0
  %149 = vmatprep.subr.bf16.mxu0 0
  %150 = vmatpush1.bf16.msra.mxu0 0
  %151 = vmatprep.subr.bf16.mxu0 0
  %152 = vmatpush1.bf16.msra.mxu0 0
  %153 = vmatprep.subr.bf16.mxu0 0
  %154 = vmatpush1.bf16.msra.mxu0 0
  %155 = vmatprep.subr.bf16.mxu0 0
  %156 = vmatpush1.bf16.msra.mxu0 0
  %157 = vmatprep.subr.bf16.mxu0 0
  %158 = vmatpush1.bf16.msra.mxu0 0
  %159 = vmatprep.subr.bf16.mxu0 0
  %160 = vmatpush1.bf16.msra.mxu0 0
  %161 = vmatprep.subr.bf16.mxu0 0
  %162 = vmatpush1.bf16.msra.mxu0 0
  %163 = vmatprep.subr.bf16.mxu0 0
  %164 = vmatpush1.bf16.msra.mxu0 0
  %165 = vmatprep.subr.bf16.mxu0 0
  %166 = vmatpush1.bf16.msra.mxu0 0
  %167 = vmatprep.subr.bf16.mxu0 0
  %168 = vmatpush1.bf16.msra.mxu0 0
  %169 = vmatprep.mubr.bf16.mxu0 0
  %170 = vmatmul.mubr.bf16.gmra.mrb[0].mxu0 %v110
  %v171 = vpop.f32.mrb[0].mxu0
  %v172 = vadd.f32 %v51, %v171
  %v173 = vpop.f32.mrb[0].mxu0
  %v174 = vpop.f32.mrb[0].mxu0
  %v175 = vadd.f32 %v51, %v174
  %v176 = vpop.f32.mrb[0].mxu0
  %177 = vmatprep.mubr.bf16.mxu0 0
  %178 = vmatmul.mubr.bf16.gmra.mrb[0].mxu0 %v113
  %v179 = vpop.f32.mrb[0].mxu0
  %v180 = vadd.f32 %v51, %v179
  %v181 = vpop.f32.mrb[0].mxu0
  %v182 = vpop.f32.mrb[0].mxu0
  %v183 = vadd.f32 %v51, %v182
  %v184 = vpop.f32.mrb[0].mxu0
  %185 = vmatprep.mubr.bf16.mxu0 0
  %186 = vmatmul.mubr.bf16.gmra.mrb[0].mxu0 %v116
  %v187 = vpop.f32.mrb[0].mxu0
  %v188 = vadd.f32 %v51, %v187
  %v189 = vpop.f32.mrb[0].mxu0
  %v190 = vpop.f32.mrb[0].mxu0
  %v191 = vadd.f32 %v51, %v190
  %v192 = vpop.f32.mrb[0].mxu0
  %193 = vmatprep.mubr.bf16.mxu0 0
  %194 = vmatmul.mubr.bf16.gmra.mrb[0].mxu0 %v119
  %v195 = vpop.f32.mrb[0].mxu0
  %v196 = vadd.f32 %v51, %v195
  %v197 = vpop.f32.mrb[0].mxu0
  %v198 = vpop.f32.mrb[0].mxu0
  %v199 = vadd.f32 %v51, %v198
  %v200 = vpop.f32.mrb[0].mxu0
  %201 = vmatprep.mubr.bf16.mxu0 0
  %202 = vmatmul.mubr.bf16.gmra.mrb[0].mxu0 %v122
  %v203 = vpop.f32.mrb[0].mxu0
  %v204 = vadd.f32 %v51, %v203
  %v205 = vpop.f32.mrb[0].mxu0
  %v206 = vpop.f32.mrb[0].mxu0
  %v207 = vadd.f32 %v51, %v206
  %v208 = vpop.f32.mrb[0].mxu0
  %209 = vmatprep.mubr.bf16.mxu0 0
  %210 = vmatmul.mubr.bf16.gmra.mrb[0].mxu0 %v125
  %v211 = vpop.f32.mrb[0].mxu0
  %v212 = vadd.f32 %v51, %v211
  %v213 = vpop.f32.mrb[0].mxu0
  %v214 = vpop.f32.mrb[0].mxu0
  %v215 = vadd.f32 %v51, %v214
  %v216 = vpop.f32.mrb[0].mxu0
  %217 = vmatprep.mubr.bf16.mxu0 0
  %218 = vmatmul.mubr.bf16.gmra.mrb[0].mxu0 %v128
  %v219 = vpop.f32.mrb[0].mxu0
  %v220 = vadd.f32 %v51, %v219
  %v221 = vpop.f32.mrb[0].mxu0
  %v222 = vpop.f32.mrb[0].mxu0
  %v223 = vadd.f32 %v51, %v222
  %v224 = vpop.f32.mrb[0].mxu0
  %225 = vmatprep.mubr.bf16.mxu0 0
  %226 = vmatmul.mubr.bf16.gmra.mrb[0].mxu0 %v131
  %v227 = vpop.f32.mrb[0].mxu0
  %v228 = vadd.f32 %v51, %v227
  %v229 = vpop.f32.mrb[0].mxu0
  %v230 = vpop.f32.mrb[0].mxu0
  %v231 = vadd.f32 %v51, %v230
  %v232 = vpop.f32.mrb[0].mxu0
  %233 = vdwg.mxu0
  %vm234 = vcmask 64512
  %235 = vst.msk [vmem:[%s5] sm:$0xff] %vm234, %v172
  %236 = vst.msk [vmem:[%s5 + $0x8] sm:$0xff] %vm234, %v175
  %237 = vst.msk [vmem:[%s5 + $0x10] sm:$0xff] %vm234, %v180
  %238 = vst.msk [vmem:[%s5 + $0x18] sm:$0xff] %vm234, %v183
  %239 = vst.msk [vmem:[%s5 + $0x20] sm:$0xff] %vm234, %v188
  %240 = vst.msk [vmem:[%s5 + $0x28] sm:$0xff] %vm234, %v191
  %241 = vst.msk [vmem:[%s5 + $0x30] sm:$0xff] %vm234, %v196
  %242 = vst.msk [vmem:[%s5 + $0x38] sm:$0xff] %vm234, %v199
  %243 = vst.msk [vmem:[%s5 + $0x40] sm:$0xff] %vm234, %v204
  %244 = vst.msk [vmem:[%s5 + $0x48] sm:$0xff] %vm234, %v207
  %245 = vst.msk [vmem:[%s5 + $0x50] sm:$0xff] %vm234, %v212
  %246 = vst.msk [vmem:[%s5 + $0x58] sm:$0xff] %vm234, %v215
  %247 = vst.msk [vmem:[%s5 + $0x60] sm:$0xff] %vm234, %v220
  %248 = vst.msk [vmem:[%s5 + $0x68] sm:$0xff] %vm234, %v223
  %249 = vst.msk [vmem:[%s5 + $0x70] sm:$0xff] %vm234, %v228
  %250 = vst.msk [vmem:[%s5 + $0x78] sm:$0xff] %vm234, %v231
  %v251 = vld [vmem:[%s3] sm:$0x3]
  %v252 = vld [vmem:[%s4] sm:$0x1]
  %v254 = vlaneseq
  %v255 = vshrl.u32 %v254, 7
  %v256 = vsub.s32 0, %v255
  %v257 = vrot.slane %v252, %v256
  %259 = vrot.lane.b32.xlu0 %v85, 112
  %v260 = vpop.permute.xlu0 %259
  %261 = vrot.lane.b32.xlu0 %v86, 112
  %v262 = vpop.permute.xlu0 %261
  %263 = vrot.lane.b32.xlu0 %v87, 112
  %v264 = vpop.permute.xlu0 %263
  %265 = vrot.lane.b32.xlu0 %v88, 112
  %v266 = vpop.permute.xlu0 %265
  %267 = vrot.lane.b32.xlu0 %v89, 112
  %v268 = vpop.permute.xlu0 %267
  %269 = vrot.lane.b32.xlu0 %v90, 112
  %v270 = vpop.permute.xlu0 %269
  %271 = vrot.lane.b32.xlu0 %v91, 112
  %v272 = vpop.permute.xlu0 %271
  %273 = vrot.lane.b32.xlu0 %v92, 112
  %v274 = vpop.permute.xlu0 %273
  %vm275 = vcmask 31744
  %v277 = vsel %vm275, %v260, 0
  %v280 = vsel %vm275, %v262, 0
  %v283 = vsel %vm275, %v264, 0
  %v286 = vsel %vm275, %v266, 0
  %v289 = vsel %vm275, %v268, 0
  %v292 = vsel %vm275, %v270, 0
  %v295 = vsel %vm275, %v272, 0
  %v298 = vsel %vm275, %v274, 0
  %v301 = vsel %vm133, %v251, 0
  %303 = vmatprep.subr.bf16.mxu0 0
  %304 = vmatpush1.bf16.msra.mxu0 %v301
  %305 = vmatprep.subr.bf16.mxu0 0
  %306 = vmatpush1.bf16.msra.mxu0 0
  %307 = vmatprep.subr.bf16.mxu0 0
  %308 = vmatpush1.bf16.msra.mxu0 0
  %309 = vmatprep.subr.bf16.mxu0 0
  %310 = vmatpush1.bf16.msra.mxu0 0
  %311 = vmatprep.subr.bf16.mxu0 0
  %312 = vmatpush1.bf16.msra.mxu0 0
  %313 = vmatprep.subr.bf16.mxu0 0
  %314 = vmatpush1.bf16.msra.mxu0 0
  %315 = vmatprep.subr.bf16.mxu0 0
  %316 = vmatpush1.bf16.msra.mxu0 0
  %317 = vmatprep.subr.bf16.mxu0 0
  %318 = vmatpush1.bf16.msra.mxu0 0
  %319 = vmatprep.subr.bf16.mxu0 0
  %320 = vmatpush1.bf16.msra.mxu0 0
  %321 = vmatprep.subr.bf16.mxu0 0
  %322 = vmatpush1.bf16.msra.mxu0 0
  %323 = vmatprep.subr.bf16.mxu0 0
  %324 = vmatpush1.bf16.msra.mxu0 0
  %325 = vmatprep.subr.bf16.mxu0 0
  %326 = vmatpush1.bf16.msra.mxu0 0
  %327 = vmatprep.subr.bf16.mxu0 0
  %328 = vmatpush1.bf16.msra.mxu0 0
  %329 = vmatprep.subr.bf16.mxu0 0
  %330 = vmatpush1.bf16.msra.mxu0 0
  %331 = vmatprep.subr.bf16.mxu0 0
  %332 = vmatpush1.bf16.msra.mxu0 0
  %333 = vmatprep.subr.bf16.mxu0 0
  %334 = vmatpush1.bf16.msra.mxu0 0
  %335 = vmatprep.mubr.bf16.mxu0 0
  %336 = vmatmul.mubr.bf16.gmra.mrb[0].mxu0 %v277
  %v337 = vpop.f32.mrb[0].mxu0
  %v338 = vadd.f32 %v257, %v337
  %v339 = vpop.f32.mrb[0].mxu0
  %v340 = vpop.f32.mrb[0].mxu0
  %v341 = vadd.f32 %v257, %v340
  %v342 = vpop.f32.mrb[0].mxu0
  %343 = vmatprep.mubr.bf16.mxu0 0
  %344 = vmatmul.mubr.bf16.gmra.mrb[0].mxu0 %v280
  %v345 = vpop.f32.mrb[0].mxu0
  %v346 = vadd.f32 %v257, %v345
  %v347 = vpop.f32.mrb[0].mxu0
  %v348 = vpop.f32.mrb[0].mxu0
  %v349 = vadd.f32 %v257, %v348
  %v350 = vpop.f32.mrb[0].mxu0
  %351 = vmatprep.mubr.bf16.mxu0 0
  %352 = vmatmul.mubr.bf16.gmra.mrb[0].mxu0 %v283
  %v353 = vpop.f32.mrb[0].mxu0
  %v354 = vadd.f32 %v257, %v353
  %v355 = vpop.f32.mrb[0].mxu0
  %v356 = vpop.f32.mrb[0].mxu0
  %v357 = vadd.f32 %v257, %v356
  %v358 = vpop.f32.mrb[0].mxu0
  %359 = vmatprep.mubr.bf16.mxu0 0
  %360 = vmatmul.mubr.bf16.gmra.mrb[0].mxu0 %v286
  %v361 = vpop.f32.mrb[0].mxu0
  %v362 = vadd.f32 %v257, %v361
  %v363 = vpop.f32.mrb[0].mxu0
  %v364 = vpop.f32.mrb[0].mxu0
  %v365 = vadd.f32 %v257, %v364
  %v366 = vpop.f32.mrb[0].mxu0
  %367 = vmatprep.mubr.bf16.mxu0 0
  %368 = vmatmul.mubr.bf16.gmra.mrb[0].mxu0 %v289
  %v369 = vpop.f32.mrb[0].mxu0
  %v370 = vadd.f32 %v257, %v369
  %v371 = vpop.f32.mrb[0].mxu0
  %v372 = vpop.f32.mrb[0].mxu0
  %v373 = vadd.f32 %v257, %v372
  %v374 = vpop.f32.mrb[0].mxu0
  %375 = vmatprep.mubr.bf16.mxu0 0
  %376 = vmatmul.mubr.bf16.gmra.mrb[0].mxu0 %v292
  %v377 = vpop.f32.mrb[0].mxu0
  %v378 = vadd.f32 %v257, %v377
  %v379 = vpop.f32.mrb[0].mxu0
  %v380 = vpop.f32.mrb[0].mxu0
  %v381 = vadd.f32 %v257, %v380
  %v382 = vpop.f32.mrb[0].mxu0
  %383 = vmatprep.mubr.bf16.mxu0 0
  %384 = vmatmul.mubr.bf16.gmra.mrb[0].mxu0 %v295
  %v385 = vpop.f32.mrb[0].mxu0
  %v386 = vadd.f32 %v257, %v385
  %v387 = vpop.f32.mrb[0].mxu0
  %v388 = vpop.f32.mrb[0].mxu0
  %v389 = vadd.f32 %v257, %v388
  %v390 = vpop.f32.mrb[0].mxu0
  %391 = vmatprep.mubr.bf16.mxu0 0
  %392 = vmatmul.mubr.bf16.gmra.mrb[0].mxu0 %v298
  %v393 = vpop.f32.mrb[0].mxu0
  %v394 = vadd.f32 %v257, %v393
  %v395 = vpop.f32.mrb[0].mxu0
  %v396 = vpop.f32.mrb[0].mxu0
  %v397 = vadd.f32 %v257, %v396
  %v398 = vpop.f32.mrb[0].mxu0
  %399 = vdwg.mxu0
  %400 = vst.msk [vmem:[%s6] sm:$0xff] %vm234, %v338
  %401 = vst.msk [vmem:[%s6 + $0x8] sm:$0xff] %vm234, %v341
  %402 = vst.msk [vmem:[%s6 + $0x10] sm:$0xff] %vm234, %v346
  %403 = vst.msk [vmem:[%s6 + $0x18] sm:$0xff] %vm234, %v349
  %404 = vst.msk [vmem:[%s6 + $0x20] sm:$0xff] %vm234, %v354
  %405 = vst.msk [vmem:[%s6 + $0x28] sm:$0xff] %vm234, %v357
  %406 = vst.msk [vmem:[%s6 + $0x30] sm:$0xff] %vm234, %v362
  %407 = vst.msk [vmem:[%s6 + $0x38] sm:$0xff] %vm234, %v365
  %408 = vst.msk [vmem:[%s6 + $0x40] sm:$0xff] %vm234, %v370
  %409 = vst.msk [vmem:[%s6 + $0x48] sm:$0xff] %vm234, %v373
  %410 = vst.msk [vmem:[%s6 + $0x50] sm:$0xff] %vm234, %v378
  %411 = vst.msk [vmem:[%s6 + $0x58] sm:$0xff] %vm234, %v381
  %412 = vst.msk [vmem:[%s6 + $0x60] sm:$0xff] %vm234, %v386
  %413 = vst.msk [vmem:[%s6 + $0x68] sm:$0xff] %vm234, %v389
  %414 = vst.msk [vmem:[%s6 + $0x70] sm:$0xff] %vm234, %v394
  %415 = vst.msk [vmem:[%s6 + $0x78] sm:$0xff] %vm234, %v397
  %s416 = smul.u32 0, 128
  %v417 = vlaneseq
  %v418 = vshrl.u32 %v417, 7
  %v419 = vadd.s32 %v418, 8
  %v420 = vadd.s32 %v418, 16
  %v421 = vadd.s32 %v418, 24
  %v422 = vadd.s32 %v418, 32
  %v423 = vadd.s32 %v418, 40
  %v424 = vadd.s32 %v418, 48
  %v425 = vadd.s32 %v418, 56
  %v426 = vadd.s32 %v418, 64
  %v427 = vadd.s32 %v418, 72
  %v428 = vadd.s32 %v418, 80
  %v429 = vadd.s32 %v418, 88
  %v430 = vadd.s32 %v418, 96
  %v431 = vadd.s32 %v418, 104
  %v432 = vadd.s32 %v418, 112
  %v433 = vadd.s32 %v418, 120
  %v434 = vstv %s416
  %v435 = vadd.s32 %v434, %v418
  %v436 = vadd.s32 %v434, %v419
  %v437 = vadd.s32 %v434, %v420
  %v438 = vadd.s32 %v434, %v421
  %v439 = vadd.s32 %v434, %v422
  %v440 = vadd.s32 %v434, %v423
  %v441 = vadd.s32 %v434, %v424
  %v442 = vadd.s32 %v434, %v425
  %v443 = vadd.s32 %v434, %v426
  %v444 = vadd.s32 %v434, %v427
  %v445 = vadd.s32 %v434, %v428
  %v446 = vadd.s32 %v434, %v429
  %v447 = vadd.s32 %v434, %v430
  %v448 = vadd.s32 %v434, %v431
  %v449 = vadd.s32 %v434, %v432
  %v450 = vadd.s32 %v434, %v433
  %vm451 = vcmp.lt.s32.totalorder %v435, 128
  %vm452 = vcmp.lt.s32.totalorder %v436, 128
  %vm453 = vcmp.lt.s32.totalorder %v437, 128
  %vm454 = vcmp.lt.s32.totalorder %v438, 128
  %vm455 = vcmp.lt.s32.totalorder %v439, 128
  %vm456 = vcmp.lt.s32.totalorder %v440, 128
  %vm457 = vcmp.lt.s32.totalorder %v441, 128
  %vm458 = vcmp.lt.s32.totalorder %v442, 128
  %vm459 = vcmp.lt.s32.totalorder %v443, 128
  %vm460 = vcmp.lt.s32.totalorder %v444, 128
  %vm461 = vcmp.lt.s32.totalorder %v445, 128
  %vm462 = vcmp.lt.s32.totalorder %v446, 128
  %vm463 = vcmp.lt.s32.totalorder %v447, 128
  %vm464 = vcmp.lt.s32.totalorder %v448, 128
  %vm465 = vcmp.lt.s32.totalorder %v449, 128
  %vm466 = vcmp.lt.s32.totalorder %v450, 128
  %v467 = vsel %vm451, 1, 0
  %v468 = vsel %vm452, 1, 0
  %v469 = vsel %vm453, 1, 0
  %v470 = vsel %vm454, 1, 0
  %v471 = vsel %vm455, 1, 0
  %v472 = vsel %vm456, 1, 0
  %v473 = vsel %vm457, 1, 0
  %v474 = vsel %vm458, 1, 0
  %v475 = vsel %vm459, 1, 0
  %v476 = vsel %vm460, 1, 0
  %v477 = vsel %vm461, 1, 0
  %v478 = vsel %vm462, 1, 0
  %v479 = vsel %vm463, 1, 0
  %v480 = vsel %vm464, 1, 0
  %v481 = vsel %vm465, 1, 0
  %v482 = vsel %vm466, 1, 0
  %vm483 = vcmp.eq.s32.totalorder %v467, 1
  %vm484 = vcmp.eq.s32.totalorder %v468, 1
  %vm485 = vcmp.eq.s32.totalorder %v469, 1
  %vm486 = vcmp.eq.s32.totalorder %v470, 1
  %vm487 = vcmp.eq.s32.totalorder %v471, 1
  %vm488 = vcmp.eq.s32.totalorder %v472, 1
  %vm489 = vcmp.eq.s32.totalorder %v473, 1
  %vm490 = vcmp.eq.s32.totalorder %v474, 1
  %vm491 = vcmp.eq.s32.totalorder %v475, 1
  %vm492 = vcmp.eq.s32.totalorder %v476, 1
  %vm493 = vcmp.eq.s32.totalorder %v477, 1
  %vm494 = vcmp.eq.s32.totalorder %v478, 1
  %vm495 = vcmp.eq.s32.totalorder %v479, 1
  %vm496 = vcmp.eq.s32.totalorder %v480, 1
  %vm497 = vcmp.eq.s32.totalorder %v481, 1
  %vm498 = vcmp.eq.s32.totalorder %v482, 1
  %v499 = vsel %vm483, %v172, 0.0
  %v500 = vsel %vm484, %v175, 0.0
  %v501 = vsel %vm485, %v180, 0.0
  %v502 = vsel %vm486, %v183, 0.0
  %v503 = vsel %vm487, %v188, 0.0
  %v504 = vsel %vm488, %v191, 0.0
  %v505 = vsel %vm489, %v196, 0.0
  %v506 = vsel %vm490, %v199, 0.0
  %v507 = vsel %vm491, %v204, 0.0
  %v508 = vsel %vm492, %v207, 0.0
  %v509 = vsel %vm493, %v212, 0.0
  %v510 = vsel %vm494, %v215, 0.0
  %v511 = vsel %vm495, %v220, 0.0
  %v512 = vsel %vm496, %v223, 0.0
  %v513 = vsel %vm497, %v228, 0.0
  %v514 = vsel %vm498, %v231, 0.0
  %p515 = scmp.eq.s32.totalorder 0, 0
  // Predicated region
  $region22: #{downsample_forward.6} parent=0 // pred_check
    %p516 = pneg %p515
  $region23: #{downsample_forward.6} parent=0 // pred_check_branch
    %518 = sbr.rel (%p516) target = $region25
  $region24: #{downsample_forward.6} parent=0 // pred_region
    %vm519 = vcmask 57344
    %520 = vst.msk [vmem:[%s7] sm:$0x1] %vm519, 0.0
    %521 = vst.msk [vmem:[%s8] sm:$0x1] %vm519, 0.0
  $region25: #{downsample_forward.6} parent=0 // pred_fallthru
    _
  %v522 = vld [vmem:[%s7] sm:$0x1]
  %v523 = vsel %vm234, %v499, 0.0
  %v524 = vsel %vm234, %v500, 0.0
  %v525 = vadd.f32 %v523, %v524
  %v526 = vsel %vm234, %v501, 0.0
  %v527 = vadd.f32 %v525, %v526
  %v528 = vsel %vm234, %v502, 0.0
  %v529 = vadd.f32 %v527, %v528
  %v530 = vsel %vm234, %v503, 0.0
  %v531 = vadd.f32 %v529, %v530
  %v532 = vsel %vm234, %v504, 0.0
  %v533 = vadd.f32 %v531, %v532
  %v534 = vsel %vm234, %v505, 0.0
  %v535 = vadd.f32 %v533, %v534
  %v536 = vsel %vm234, %v506, 0.0
  %v537 = vadd.f32 %v535, %v536
  %v538 = vsel %vm234, %v507, 0.0
  %v539 = vadd.f32 %v537, %v538
  %v540 = vsel %vm234, %v508, 0.0
  %v541 = vadd.f32 %v539, %v540
  %v542 = vsel %vm234, %v509, 0.0
  %v543 = vadd.f32 %v541, %v542
  %v544 = vsel %vm234, %v510, 0.0
  %v545 = vadd.f32 %v543, %v544
  %v546 = vsel %vm234, %v511, 0.0
  %v547 = vadd.f32 %v545, %v546
  %v548 = vsel %vm234, %v512, 0.0
  %v549 = vadd.f32 %v547, %v548
  %v550 = vsel %vm234, %v513, 0.0
  %v551 = vadd.f32 %v549, %v550
  %v552 = vsel %vm234, %v514, 0.0
  %v553 = vadd.f32 %v551, %v552
  %v554 = vrot.slane %v553, 4
  %v555 = vadd.f32 %v553, %v554
  %v556 = vrot.slane %v555, 2
  %v557 = vadd.f32 %v555, %v556
  %v558 = vrot.slane %v557, 1
  %v559 = vadd.f32 %v557, %v558
  %v560 = vadd.f32 %v522, %v559
  %vm561 = vcmask 57344
  %562 = vst.msk [vmem:[%s7] sm:$0x1] %vm561, %v560
  %v563 = vld [vmem:[%s8] sm:$0x1]
  %v564 = vmul.f32 %v499, %v499
  %v565 = vmul.f32 %v500, %v500
  %v566 = vmul.f32 %v501, %v501
  %v567 = vmul.f32 %v502, %v502
  %v568 = vmul.f32 %v503, %v503
  %v569 = vmul.f32 %v504, %v504
  %v570 = vmul.f32 %v505, %v505
  %v571 = vmul.f32 %v506, %v506
  %v572 = vmul.f32 %v507, %v507
  %v573 = vmul.f32 %v508, %v508
  %v574 = vmul.f32 %v509, %v509
  %v575 = vmul.f32 %v510, %v510
  %v576 = vmul.f32 %v511, %v511
  %v577 = vmul.f32 %v512, %v512
  %v578 = vmul.f32 %v513, %v513
  %v579 = vmul.f32 %v514, %v514
  %v580 = vsel %vm234, %v564, 0.0
  %v581 = vsel %vm234, %v565, 0.0
  %v582 = vadd.f32 %v580, %v581
  %v583 = vsel %vm234, %v566, 0.0
  %v584 = vadd.f32 %v582, %v583
  %v585 = vsel %vm234, %v567, 0.0
  %v586 = vadd.f32 %v584, %v585
  %v587 = vsel %vm234, %v568, 0.0
  %v588 = vadd.f32 %v586, %v587
  %v589 = vsel %vm234, %v569, 0.0
  %v590 = vadd.f32 %v588, %v589
  %v591 = vsel %vm234, %v570, 0.0
  %v592 = vadd.f32 %v590, %v591
  %v593 = vsel %vm234, %v571, 0.0
  %v594 = vadd.f32 %v592, %v593
  %v595 = vsel %vm234, %v572, 0.0
  %v596 = vadd.f32 %v594, %v595
  %v597 = vsel %vm234, %v573, 0.0
  %v598 = vadd.f32 %v596, %v597
  %v599 = vsel %vm234, %v574, 0.0
  %v600 = vadd.f32 %v598, %v599
  %v601 = vsel %vm234, %v575, 0.0
  %v602 = vadd.f32 %v600, %v601
  %v603 = vsel %vm234, %v576, 0.0
  %v604 = vadd.f32 %v602, %v603
  %v605 = vsel %vm234, %v577, 0.0
  %v606 = vadd.f32 %v604, %v605
  %v607 = vsel %vm234, %v578, 0.0
  %v608 = vadd.f32 %v606, %v607
  %v609 = vsel %vm234, %v579, 0.0
  %v610 = vadd.f32 %v608, %v609
  %v611 = vrot.slane %v610, 4
  %v612 = vadd.f32 %v610, %v611
  %v613 = vrot.slane %v612, 2
  %v614 = vadd.f32 %v612, %v613
  %v615 = vrot.slane %v614, 1
  %v616 = vadd.f32 %v614, %v615
  %v617 = vadd.f32 %v563, %v616
  %618 = vst.msk [vmem:[%s8] sm:$0x1] %vm561, %v617
  // Predicated region
  $region26: #{downsample_forward.6} parent=0 // pred_check
    _
  $region27: #{downsample_forward.6} parent=0 // pred_check_branch
    %620 = sbr.rel (0) target = $region29
  $region28: #{downsample_forward.6} parent=0 // pred_region
    _
  $region29: #{downsample_forward.6} parent=0 // pred_fallthru
    _
  // Predicated region
  $region30: #{downsample_forward.6} parent=0 // pred_check
    _
  $region31: #{downsample_forward.6} parent=0 // pred_check_branch
    %622 = sbr.rel (0) target = $region33
  $region32: #{downsample_forward.6} parent=0 // pred_region
    _
  $region33: #{downsample_forward.6} parent=0 // pred_fallthru
    _
  // Predicated region
  $region34: #{downsample_forward.6} parent=0 // pred_check
    _
  $region35: #{downsample_forward.6} parent=0 // pred_check_branch
    %624 = sbr.rel (0) target = $region37
  $region36: #{downsample_forward.6} parent=0 // pred_region
    _
  $region37: #{downsample_forward.6} parent=0 // pred_fallthru
    _
  // Predicated region
  $region38: #{downsample_forward.6} parent=0 // pred_check
    _
  $region39: #{downsample_forward.6} parent=0 // pred_check_branch
    %626 = sbr.rel (0) target = $region41
  $region40: #{downsample_forward.6} parent=0 // pred_region
    _
  $region41: #{downsample_forward.6} parent=0 // pred_fallthru
    _
  // Predicated region
  $region42: #{downsample_forward.6} parent=0 // pred_check
    _
  $region43: #{downsample_forward.6} parent=0 // pred_check_branch
    %628 = sbr.rel (0) target = $region45
  $region44: #{downsample_forward.6} parent=0 // pred_region
    _
  $region45: #{downsample_forward.6} parent=0 // pred_fallthru
    _
  // Predicated region
  $region46: #{downsample_forward.6} parent=0 // pred_check
    _
  $region47: #{downsample_forward.6} parent=0 // pred_check_branch
    %630 = sbr.rel (0) target = $region49
  $region48: #{downsample_forward.6} parent=0 // pred_region
    _
  $region49: #{downsample_forward.6} parent=0 // pred_fallthru
    _
  // Predicated region
  $region50: #{downsample_forward.6} parent=0 // pred_check
    _
  $region51: #{downsample_forward.6} parent=0 // pred_check_branch
    %632 = sbr.rel (0) target = $region53
  $region52: #{downsample_forward.6} parent=0 // pred_region
    _
  $region53: #{downsample_forward.6} parent=0 // pred_fallthru
    _
  // Predicated region
  $region54: #{downsample_forward.6} parent=0 // pred_check
    _
  $region55: #{downsample_forward.6} parent=0 // pred_check_branch
    %634 = sbr.rel (0) target = $region57
  $region56: #{downsample_forward.6} parent=0 // pred_region
    _
  $region57: #{downsample_forward.6} parent=0 // pred_fallthru
    _

// kernel: downsample_forward.11
$region0: #{downsample_forward.11}
  #allocation0 [shape = 'u32[]', space=smem, size = 0x4, offset = 0x4, fixed_abs, tag = 'smem constant byte address 0x4 - core index']
  #allocation1 [shape = 'u32[144,128]{1,0:T(1,128)}', space=vmem, size = 0x12000, scoped, tag = 'internal scratch']
  %s0 = inlined_call_operand.vmem [shape: f32[128,8], index: 0, kind: input, shape index: {}]
  %s1 = inlined_call_operand.vmem [shape: f32[1,8], index: 1, kind: input, shape index: {}]
  %s2 = inlined_call_operand.vmem [shape: f32[1,8], index: 2, kind: input, shape index: {}]
  %s3 = inlined_call_operand.vmem [shape: f32[1,8], index: 3, kind: input, shape index: {}]
  %s4 = inlined_call_operand.vmem [shape: f32[1,8], index: 4, kind: input, shape index: {}]
  %s5 = inlined_call_operand.vmem [shape: f32[128,8], index: 5, kind: input, shape index: {}]
  %s6 = inlined_call_operand.vmem [shape: f32[128,8], index: 6, kind: output, shape index: {}]
  %s7 = sld [smem:[#allocation0]]
  $region34: #{downsample_forward.11} parent=0
    _
  %s9 = ssub.s32 1, %s7
  %s10 = scalar_select 0, %s9, %s7
  // Predicated region
  $region2: #{downsample_forward.11} parent=0 // pred_check
    _
  $region3: #{downsample_forward.11} parent=0 // pred_check_branch
    %12 = sbr.rel (0) target = $region5
  $region4: #{downsample_forward.11} parent=0 // pred_region
    _
  $region5: #{downsample_forward.11} parent=0 // pred_fallthru
    _
  // Predicated region
  $region6: #{downsample_forward.11} parent=0 // pred_check
    _
  $region7: #{downsample_forward.11} parent=0 // pred_check_branch
    %14 = sbr.rel (0) target = $region9
  $region8: #{downsample_forward.11} parent=0 // pred_region
    _
  $region9: #{downsample_forward.11} parent=0 // pred_fallthru
    _
  // Predicated region
  $region10: #{downsample_forward.11} parent=0 // pred_check
    _
  $region11: #{downsample_forward.11} parent=0 // pred_check_branch
    %16 = sbr.rel (0) target = $region13
  $region12: #{downsample_forward.11} parent=0 // pred_region
    _
  $region13: #{downsample_forward.11} parent=0 // pred_fallthru
    _
  // Predicated region
  $region14: #{downsample_forward.11} parent=0 // pred_check
    _
  $region15: #{downsample_forward.11} parent=0 // pred_check_branch
    %18 = sbr.rel (0) target = $region17
  $region16: #{downsample_forward.11} parent=0 // pred_region
    _
  $region17: #{downsample_forward.11} parent=0 // pred_fallthru
    _
  // Predicated region
  $region18: #{downsample_forward.11} parent=0 // pred_check
    _
  $region19: #{downsample_forward.11} parent=0 // pred_check_branch
    %20 = sbr.rel (0) target = $region21
  $region20: #{downsample_forward.11} parent=0 // pred_region
    _
  $region21: #{downsample_forward.11} parent=0 // pred_fallthru
    _
  // Predicated region
  $region22: #{downsample_forward.11} parent=0 // pred_check
    _
  $region23: #{downsample_forward.11} parent=0 // pred_check_branch
    %22 = sbr.rel (0) target = $region25
  $region24: #{downsample_forward.11} parent=0 // pred_region
    _
  $region25: #{downsample_forward.11} parent=0 // pred_fallthru
    _
  %v23 = vld [vmem:[%s1] sm:$0x1]
  %v24 = vmul.f32 %v23, 0.0078125
  %v25 = vld [vmem:[%s2] sm:$0x1]
  %v26 = vmul.f32 %v25, 0.0078125
  %v27 = vmul.f32 %v24, %v24
  %v28 = vsub.f32 %v26, %v27
  %v29 = vmax.f32 %v28, 0.0
  %v30 = vld [vmem:[%s3] sm:$0x1]
  %v31 = vadd.f32 %v29, 1e-05
  %v32 = vrsqrt.pop %v31
  %v33 = vmul.f32 %v30, %v32
  %v34 = vld [vmem:[%s4] sm:$0x1]
  %v35 = vmul.f32 %v24, %v33
  %v36 = vsub.f32 %v34, %v35
  %v37 = vld [vmem:[%s0] sm:$0xff]
  %v38 = vld [vmem:[%s0 + $0x8] sm:$0xff]
  %v39 = vld [vmem:[%s0 + $0x10] sm:$0xff]
  %v40 = vld [vmem:[%s0 + $0x18] sm:$0xff]
  %v41 = vld [vmem:[%s0 + $0x20] sm:$0xff]
  %v42 = vld [vmem:[%s0 + $0x28] sm:$0xff]
  %v43 = vld [vmem:[%s0 + $0x30] sm:$0xff]
  %v44 = vld [vmem:[%s0 + $0x38] sm:$0xff]
  %v45 = vld [vmem:[%s0 + $0x40] sm:$0xff]
  %v46 = vld [vmem:[%s0 + $0x48] sm:$0xff]
  %v47 = vld [vmem:[%s0 + $0x50] sm:$0xff]
  %v48 = vld [vmem:[%s0 + $0x58] sm:$0xff]
  %v49 = vld [vmem:[%s0 + $0x60] sm:$0xff]
  %v50 = vld [vmem:[%s0 + $0x68] sm:$0xff]
  %v51 = vld [vmem:[%s0 + $0x70] sm:$0xff]
  %v52 = vld [vmem:[%s0 + $0x78] sm:$0xff]
  %v54 = vlaneseq
  %v55 = vshrl.u32 %v54, 7
  %v56 = vsub.s32 0, %v55
  %v57 = vrot.slane %v33, %v56
  %v59 = vmul.f32 %v37, %v57
  %v60 = vmul.f32 %v38, %v57
  %v61 = vmul.f32 %v39, %v57
  %v62 = vmul.f32 %v40, %v57
  %v63 = vmul.f32 %v41, %v57
  %v64 = vmul.f32 %v42, %v57
  %v65 = vmul.f32 %v43, %v57
  %v66 = vmul.f32 %v44, %v57
  %v67 = vmul.f32 %v45, %v57
  %v68 = vmul.f32 %v46, %v57
  %v69 = vmul.f32 %v47, %v57
  %v70 = vmul.f32 %v48, %v57
  %v71 = vmul.f32 %v49, %v57
  %v72 = vmul.f32 %v50, %v57
  %v73 = vmul.f32 %v51, %v57
  %v74 = vmul.f32 %v52, %v57
  %v76 = vlaneseq
  %v77 = vshrl.u32 %v76, 7
  %v78 = vsub.s32 0, %v77
  %v79 = vrot.slane %v36, %v78
  %v81 = vadd.f32 %v59, %v79
  %v82 = vadd.f32 %v60, %v79
  %v83 = vadd.f32 %v61, %v79
  %v84 = vadd.f32 %v62, %v79
  %v85 = vadd.f32 %v63, %v79
  %v86 = vadd.f32 %v64, %v79
  %v87 = vadd.f32 %v65, %v79
  %v88 = vadd.f32 %v66, %v79
  %v89 = vadd.f32 %v67, %v79
  %v90 = vadd.f32 %v68, %v79
  %v91 = vadd.f32 %v69, %v79
  %v92 = vadd.f32 %v70, %v79
  %v93 = vadd.f32 %v71, %v79
  %v94 = vadd.f32 %v72, %v79
  %v95 = vadd.f32 %v73, %v79
  %v96 = vadd.f32 %v74, %v79
  %vm97 = vcmp.ge.f32.partialorder %v81, 0.0
  %vm98 = vcmp.ge.f32.partialorder %v82, 0.0
  %vm99 = vcmp.ge.f32.partialorder %v83, 0.0
  %vm100 = vcmp.ge.f32.partialorder %v84, 0.0
  %vm101 = vcmp.ge.f32.partialorder %v85, 0.0
  %vm102 = vcmp.ge.f32.partialorder %v86, 0.0
  %vm103 = vcmp.ge.f32.partialorder %v87, 0.0
  %vm104 = vcmp.ge.f32.partialorder %v88, 0.0
  %vm105 = vcmp.ge.f32.partialorder %v89, 0.0
  %vm106 = vcmp.ge.f32.partialorder %v90, 0.0
  %vm107 = vcmp.ge.f32.partialorder %v91, 0.0
  %vm108 = vcmp.ge.f32.partialorder %v92, 0.0
  %vm109 = vcmp.ge.f32.partialorder %v93, 0.0
  %vm110 = vcmp.ge.f32.partialorder %v94, 0.0
  %vm111 = vcmp.ge.f32.partialorder %v95, 0.0
  %vm112 = vcmp.ge.f32.partialorder %v96, 0.0
  %v113 = vmul.f32 %v81, 0.1
  %v114 = vmul.f32 %v82, 0.1
  %v115 = vmul.f32 %v83, 0.1
  %v116 = vmul.f32 %v84, 0.1
  %v117 = vmul.f32 %v85, 0.1
  %v118 = vmul.f32 %v86, 0.1
  %v119 = vmul.f32 %v87, 0.1
  %v120 = vmul.f32 %v88, 0.1
  %v121 = vmul.f32 %v89, 0.1
  %v122 = vmul.f32 %v90, 0.1
  %v123 = vmul.f32 %v91, 0.1
  %v124 = vmul.f32 %v92, 0.1
  %v125 = vmul.f32 %v93, 0.1
  %v126 = vmul.f32 %v94, 0.1
  %v127 = vmul.f32 %v95, 0.1
  %v128 = vmul.f32 %v96, 0.1
  %v129 = vsel %vm97, %v81, %v113
  %v130 = vsel %vm98, %v82, %v114
  %v131 = vsel %vm99, %v83, %v115
  %v132 = vsel %vm100, %v84, %v116
  %v133 = vsel %vm101, %v85, %v117
  %v134 = vsel %vm102, %v86, %v118
  %v135 = vsel %vm103, %v87, %v119
  %v136 = vsel %vm104, %v88, %v120
  %v137 = vsel %vm105, %v89, %v121
  %v138 = vsel %vm106, %v90, %v122
  %v139 = vsel %vm107, %v91, %v123
  %v140 = vsel %vm108, %v92, %v124
  %v141 = vsel %vm109, %v93, %v125
  %v142 = vsel %vm110, %v94, %v126
  %v143 = vsel %vm111, %v95, %v127
  %v144 = vsel %vm112, %v96, %v128
  %v145 = vld [vmem:[%s5] sm:$0xff]
  %v146 = vld [vmem:[%s5 + $0x8] sm:$0xff]
  %v147 = vld [vmem:[%s5 + $0x10] sm:$0xff]
  %v148 = vld [vmem:[%s5 + $0x18] sm:$0xff]
  %v149 = vld [vmem:[%s5 + $0x20] sm:$0xff]
  %v150 = vld [vmem:[%s5 + $0x28] sm:$0xff]
  %v151 = vld [vmem:[%s5 + $0x30] sm:$0xff]
  %v152 = vld [vmem:[%s5 + $0x38] sm:$0xff]
  %v153 = vld [vmem:[%s5 + $0x40] sm:$0xff]
  %v154 = vld [vmem:[%s5 + $0x48] sm:$0xff]
  %v155 = vld [vmem:[%s5 + $0x50] sm:$0xff]
  %v156 = vld [vmem:[%s5 + $0x58] sm:$0xff]
  %v157 = vld [vmem:[%s5 + $0x60] sm:$0xff]
  %v158 = vld [vmem:[%s5 + $0x68] sm:$0xff]
  %v159 = vld [vmem:[%s5 + $0x70] sm:$0xff]
  %v160 = vld [vmem:[%s5 + $0x78] sm:$0xff]
  %v161 = vadd.f32 %v129, %v145
  %v162 = vadd.f32 %v130, %v146
  %v163 = vadd.f32 %v131, %v147
  %v164 = vadd.f32 %v132, %v148
  %v165 = vadd.f32 %v133, %v149
  %v166 = vadd.f32 %v134, %v150
  %v167 = vadd.f32 %v135, %v151
  %v168 = vadd.f32 %v136, %v152
  %v169 = vadd.f32 %v137, %v153
  %v170 = vadd.f32 %v138, %v154
  %v171 = vadd.f32 %v139, %v155
  %v172 = vadd.f32 %v140, %v156
  %v173 = vadd.f32 %v141, %v157
  %v174 = vadd.f32 %v142, %v158
  %v175 = vadd.f32 %v143, %v159
  %v176 = vadd.f32 %v144, %v160
  %vm177 = vcmask 64512
  %178 = vst.msk [vmem:[%s6] sm:$0xff] %vm177, %v161
  %179 = vst.msk [vmem:[%s6 + $0x8] sm:$0xff] %vm177, %v162
  %180 = vst.msk [vmem:[%s6 + $0x10] sm:$0xff] %vm177, %v163
  %181 = vst.msk [vmem:[%s6 + $0x18] sm:$0xff] %vm177, %v164
  %182 = vst.msk [vmem:[%s6 + $0x20] sm:$0xff] %vm177, %v165
  %183 = vst.msk [vmem:[%s6 + $0x28] sm:$0xff] %vm177, %v166
  %184 = vst.msk [vmem:[%s6 + $0x30] sm:$0xff] %vm177, %v167
  %185 = vst.msk [vmem:[%s6 + $0x38] sm:$0xff] %vm177, %v168
  %186 = vst.msk [vmem:[%s6 + $0x40] sm:$0xff] %vm177, %v169
  %187 = vst.msk [vmem:[%s6 + $0x48] sm:$0xff] %vm177, %v170
  %188 = vst.msk [vmem:[%s6 + $0x50] sm:$0xff] %vm177, %v171
  %189 = vst.msk [vmem:[%s6 + $0x58] sm:$0xff] %vm177, %v172
  %190 = vst.msk [vmem:[%s6 + $0x60] sm:$0xff] %vm177, %v173
  %191 = vst.msk [vmem:[%s6 + $0x68] sm:$0xff] %vm177, %v174
  %192 = vst.msk [vmem:[%s6 + $0x70] sm:$0xff] %vm177, %v175
  %193 = vst.msk [vmem:[%s6 + $0x78] sm:$0xff] %vm177, %v176
  // Predicated region
  $region26: #{downsample_forward.11} parent=0 // pred_check
    _
  $region27: #{downsample_forward.11} parent=0 // pred_check_branch
    %195 = sbr.rel (0) target = $region29
  $region28: #{downsample_forward.11} parent=0 // pred_region
    _
  $region29: #{downsample_forward.11} parent=0 // pred_fallthru
    _
  // Predicated region
  $region30: #{downsample_forward.11} parent=0 // pred_check
    _
  $region31: #{downsample_forward.11} parent=0 // pred_check_branch
    %197 = sbr.rel (0) target = $region33
  $region32: #{downsample_forward.11} parent=0 // pred_region
    _
  $region33: #{downsample_forward.11} parent=0 // pred_fallthru
    _

// kernel: downsample_forward.8
$region0: #{downsample_forward.8}
  #allocation0 [shape = 'u32[]', space=smem, size = 0x4, offset = 0x4, fixed_abs, tag = 'smem constant byte address 0x4 - core index']
  #allocation1 [shape = 'u32[144,128]{1,0:T(1,128)}', space=vmem, size = 0x12000, scoped, tag = 'internal scratch']
  %s0 = inlined_call_operand.vmem [shape: bf16[128,72], index: 0, kind: input, shape index: {}]
  %s1 = inlined_call_operand.vmem [shape: bf16[72,8], index: 1, kind: input, shape index: {}]
  %s2 = inlined_call_operand.vmem [shape: f32[1,8], index: 2, kind: input, shape index: {}]
  %s3 = inlined_call_operand.vmem [shape: f32[128,8], index: 3, kind: output, shape index: {0}]
  %s4 = inlined_call_operand.vmem [shape: f32[1,8], index: 4, kind: output, shape index: {1}]
  %s5 = inlined_call_operand.vmem [shape: f32[1,8], index: 5, kind: output, shape index: {2}]
  %6 = xla_tuple %s3, %s4, %s5
  %s7 = sld [smem:[#allocation0]]
  $region42: #{downsample_forward.8} parent=0
    _
  %s9 = ssub.s32 1, %s7
  %s10 = scalar_select 0, %s9, %s7
  // Predicated region
  $region2: #{downsample_forward.8} parent=0 // pred_check
    _
  $region3: #{downsample_forward.8} parent=0 // pred_check_branch
    %12 = sbr.rel (0) target = $region5
  $region4: #{downsample_forward.8} parent=0 // pred_region
    _
  $region5: #{downsample_forward.8} parent=0 // pred_fallthru
    _
  // Predicated region
  $region6: #{downsample_forward.8} parent=0 // pred_check
    _
  $region7: #{downsample_forward.8} parent=0 // pred_check_branch
    %14 = sbr.rel (0) target = $region9
  $region8: #{downsample_forward.8} parent=0 // pred_region
    _
  $region9: #{downsample_forward.8} parent=0 // pred_fallthru
    _
  // Predicated region
  $region10: #{downsample_forward.8} parent=0 // pred_check
    _
  $region11: #{downsample_forward.8} parent=0 // pred_check_branch
    %16 = sbr.rel (0) target = $region13
  $region12: #{downsample_forward.8} parent=0 // pred_region
    _
  $region13: #{downsample_forward.8} parent=0 // pred_fallthru
    _
  %v18 = vld [vmem:[%s0] sm:$0xf]
  %v19 = vld [vmem:[%s0 + $0x4] sm:$0xf]
  %v20 = vld [vmem:[%s0 + $0x8] sm:$0xf]
  %v21 = vld [vmem:[%s0 + $0xc] sm:$0xf]
  %v22 = vld [vmem:[%s0 + $0x10] sm:$0xf]
  %v23 = vld [vmem:[%s0 + $0x14] sm:$0xf]
  %v24 = vld [vmem:[%s0 + $0x18] sm:$0xf]
  %v25 = vld [vmem:[%s0 + $0x1c] sm:$0xf]
  %v26 = vld [vmem:[%s0 + $0x20] sm:$0xf]
  %v27 = vld [vmem:[%s0 + $0x24] sm:$0xf]
  %v28 = vld [vmem:[%s0 + $0x28] sm:$0xf]
  %v29 = vld [vmem:[%s0 + $0x2c] sm:$0xf]
  %v30 = vld [vmem:[%s0 + $0x30] sm:$0xf]
  %v31 = vld [vmem:[%s0 + $0x34] sm:$0xf]
  %v32 = vld [vmem:[%s0 + $0x38] sm:$0xf]
  %v33 = vld [vmem:[%s0 + $0x3c] sm:$0xf]
  %v34 = vld [vmem:[%s1] sm:$0xf]
  %v35 = vld [vmem:[%s1 + $0x4] sm:$0xf]
  %v36 = vld [vmem:[%s1 + $0x8] sm:$0xf]
  %v37 = vld [vmem:[%s1 + $0xc] sm:$0xf]
  %v38 = vld [vmem:[%s1 + $0x10] sm:$0xf]
  %v39 = vld [vmem:[%s1 + $0x14] sm:$0xf]
  %v40 = vld [vmem:[%s1 + $0x18] sm:$0xf]
  %v41 = vld [vmem:[%s1 + $0x1c] sm:$0xf]
  %v42 = vld [vmem:[%s1 + $0x20] sm:$0xf]
  %v43 = vld [vmem:[%s2] sm:$0x1]
  %v45 = vlaneseq
  %v46 = vshrl.u32 %v45, 7
  %v47 = vsub.s32 0, %v46
  %v48 = vrot.slane %v43, %v47
  %v66 = vunpack.c.l.b16 %v18
  %v67 = vunpack.c.l.b16 %v19
  %v68 = vunpack.c.l.b16 %v20
  %v69 = vunpack.c.l.b16 %v21
  %v70 = vunpack.c.l.b16 %v22
  %v71 = vunpack.c.l.b16 %v23
  %v72 = vunpack.c.l.b16 %v24
  %v73 = vunpack.c.l.b16 %v25
  %v74 = vunpack.c.l.b16 %v26
  %v75 = vunpack.c.l.b16 %v27
  %v76 = vunpack.c.l.b16 %v28
  %v77 = vunpack.c.l.b16 %v29
  %v78 = vunpack.c.l.b16 %v30
  %v79 = vunpack.c.l.b16 %v31
  %v80 = vunpack.c.l.b16 %v32
  %v81 = vunpack.c.l.b16 %v33
  %v82 = vpack.c.b16 %v67, %v66
  %v83 = vpack.c.b16 %v69, %v68
  %v84 = vpack.c.b16 %v71, %v70
  %v85 = vpack.c.b16 %v73, %v72
  %v86 = vpack.c.b16 %v75, %v74
  %v87 = vpack.c.b16 %v77, %v76
  %v88 = vpack.c.b16 %v79, %v78
  %v89 = vpack.c.b16 %v81, %v80
  %v99 = vunpack.c.l.b16 %v34
  %v100 = vunpack.c.l.b16 %v35
  %v101 = vunpack.c.l.b16 %v36
  %v102 = vunpack.c.l.b16 %v37
  %v103 = vunpack.c.l.b16 %v38
  %v104 = vunpack.c.l.b16 %v39
  %v105 = vunpack.c.l.b16 %v40
  %v106 = vunpack.c.l.b16 %v41
  %v107 = vunpack.c.l.b16 %v42
  %v108 = vpack.c.b16 %v100, %v99
  %v109 = vpack.c.b16 %v102, %v101
  %v110 = vpack.c.b16 %v104, %v103
  %v111 = vpack.c.b16 %v106, %v105
  %v112 = vpack.c.b16 %v107, %v107
  %vm117 = vcmask 588800
  %v119 = vsel %vm117, %v82, 0
  %v122 = vsel %vm117, %v83, 0
  %v125 = vsel %vm117, %v84, 0
  %v128 = vsel %vm117, %v85, 0
  %v131 = vsel %vm117, %v86, 0
  %v134 = vsel %vm117, %v87, 0
  %v137 = vsel %vm117, %v88, 0
  %v140 = vsel %vm117, %v89, 0
  %vm142 = vcmask 1043456
  %v144 = vsel %vm142, %v112, 0
  %146 = vmatprep.subr.bf16.mxu0 0
  %147 = vmatpush1.bf16.msra.mxu0 %v108
  %148 = vmatprep.subr.bf16.mxu0 0
  %149 = vmatpush1.bf16.msra.mxu0 %v109
  %150 = vmatprep.subr.bf16.mxu0 0
  %151 = vmatpush1.bf16.msra.mxu0 %v110
  %152 = vmatprep.subr.bf16.mxu0 0
  %153 = vmatpush1.bf16.msra.mxu0 %v111
  %154 = vmatprep.subr.bf16.mxu0 0
  %155 = vmatpush1.bf16.msra.mxu0 %v144
  %156 = vmatprep.subr.bf16.mxu0 0
  %157 = vmatpush1.bf16.msra.mxu0 0
  %158 = vmatprep.subr.bf16.mxu0 0
  %159 = vmatpush1.bf16.msra.mxu0 0
  %160 = vmatprep.subr.bf16.mxu0 0
  %161 = vmatpush1.bf16.msra.mxu0 0
  %162 = vmatprep.subr.bf16.mxu0 0
  %163 = vmatpush1.bf16.msra.mxu0 0
  %164 = vmatprep.subr.bf16.mxu0 0
  %165 = vmatpush1.bf16.msra.mxu0 0
  %166 = vmatprep.subr.bf16.mxu0 0
  %167 = vmatpush1.bf16.msra.mxu0 0
  %168 = vmatprep.subr.bf16.mxu0 0
  %169 = vmatpush1.bf16.msra.mxu0 0
  %170 = vmatprep.subr.bf16.mxu0 0
  %171 = vmatpush1.bf16.msra.mxu0 0
  %172 = vmatprep.subr.bf16.mxu0 0
  %173 = vmatpush1.bf16.msra.mxu0 0
  %174 = vmatprep.subr.bf16.mxu0 0
  %175 = vmatpush1.bf16.msra.mxu0 0
  %176 = vmatprep.subr.bf16.mxu0 0
  %177 = vmatpush1.bf16.msra.mxu0 0
  %178 = vmatprep.mubr.bf16.mxu0 0
  %179 = vmatmul.mubr.bf16.gmra.mrb[0].mxu0 %v119
  %v180 = vpop.f32.mrb[0].mxu0
  %v181 = vadd.f32 %v48, %v180
  %v182 = vpop.f32.mrb[0].mxu0
  %v183 = vpop.f32.mrb[0].mxu0
  %v184 = vadd.f32 %v48, %v183
  %v185 = vpop.f32.mrb[0].mxu0
  %186 = vmatprep.mubr.bf16.mxu0 0
  %187 = vmatmul.mubr.bf16.gmra.mrb[0].mxu0 %v122
  %v188 = vpop.f32.mrb[0].mxu0
  %v189 = vadd.f32 %v48, %v188
  %v190 = vpop.f32.mrb[0].mxu0
  %v191 = vpop.f32.mrb[0].mxu0
  %v192 = vadd.f32 %v48, %v191
  %v193 = vpop.f32.mrb[0].mxu0
  %194 = vmatprep.mubr.bf16.mxu0 0
  %195 = vmatmul.mubr.bf16.gmra.mrb[0].mxu0 %v125
  %v196 = vpop.f32.mrb[0].mxu0
  %v197 = vadd.f32 %v48, %v196
  %v198 = vpop.f32.mrb[0].mxu0
  %v199 = vpop.f32.mrb[0].mxu0
  %v200 = vadd.f32 %v48, %v199
  %v201 = vpop.f32.mrb[0].mxu0
  %202 = vmatprep.mubr.bf16.mxu0 0
  %203 = vmatmul.mubr.bf16.gmra.mrb[0].mxu0 %v128
  %v204 = vpop.f32.mrb[0].mxu0
  %v205 = vadd.f32 %v48, %v204
  %v206 = vpop.f32.mrb[0].mxu0
  %v207 = vpop.f32.mrb[0].mxu0
  %v208 = vadd.f32 %v48, %v207
  %v209 = vpop.f32.mrb[0].mxu0
  %210 = vmatprep.mubr.bf16.mxu0 0
  %211 = vmatmul.mubr.bf16.gmra.mrb[0].mxu0 %v131
  %v212 = vpop.f32.mrb[0].mxu0
  %v213 = vadd.f32 %v48, %v212
  %v214 = vpop.f32.mrb[0].mxu0
  %v215 = vpop.f32.mrb[0].mxu0
  %v216 = vadd.f32 %v48, %v215
  %v217 = vpop.f32.mrb[0].mxu0
  %218 = vmatprep.mubr.bf16.mxu0 0
  %219 = vmatmul.mubr.bf16.gmra.mrb[0].mxu0 %v134
  %v220 = vpop.f32.mrb[0].mxu0
  %v221 = vadd.f32 %v48, %v220
  %v222 = vpop.f32.mrb[0].mxu0
  %v223 = vpop.f32.mrb[0].mxu0
  %v224 = vadd.f32 %v48, %v223
  %v225 = vpop.f32.mrb[0].mxu0
  %226 = vmatprep.mubr.bf16.mxu0 0
  %227 = vmatmul.mubr.bf16.gmra.mrb[0].mxu0 %v137
  %v228 = vpop.f32.mrb[0].mxu0
  %v229 = vadd.f32 %v48, %v228
  %v230 = vpop.f32.mrb[0].mxu0
  %v231 = vpop.f32.mrb[0].mxu0
  %v232 = vadd.f32 %v48, %v231
  %v233 = vpop.f32.mrb[0].mxu0
  %234 = vmatprep.mubr.bf16.mxu0 0
  %235 = vmatmul.mubr.bf16.gmra.mrb[0].mxu0 %v140
  %v236 = vpop.f32.mrb[0].mxu0
  %v237 = vadd.f32 %v48, %v236
  %v238 = vpop.f32.mrb[0].mxu0
  %v239 = vpop.f32.mrb[0].mxu0
  %v240 = vadd.f32 %v48, %v239
  %v241 = vpop.f32.mrb[0].mxu0
  %242 = vdwg.mxu0
  %vm243 = vcmask 64512
  %244 = vst.msk [vmem:[%s3] sm:$0xff] %vm243, %v181
  %245 = vst.msk [vmem:[%s3 + $0x8] sm:$0xff] %vm243, %v184
  %246 = vst.msk [vmem:[%s3 + $0x10] sm:$0xff] %vm243, %v189
  %247 = vst.msk [vmem:[%s3 + $0x18] sm:$0xff] %vm243, %v192
  %248 = vst.msk [vmem:[%s3 + $0x20] sm:$0xff] %vm243, %v197
  %249 = vst.msk [vmem:[%s3 + $0x28] sm:$0xff] %vm243, %v200
  %250 = vst.msk [vmem:[%s3 + $0x30] sm:$0xff] %vm243, %v205
  %251 = vst.msk [vmem:[%s3 + $0x38] sm:$0xff] %vm243, %v208
  %252 = vst.msk [vmem:[%s3 + $0x40] sm:$0xff] %vm243, %v213
  %253 = vst.msk [vmem:[%s3 + $0x48] sm:$0xff] %vm243, %v216
  %254 = vst.msk [vmem:[%s3 + $0x50] sm:$0xff] %vm243, %v221
  %255 = vst.msk [vmem:[%s3 + $0x58] sm:$0xff] %vm243, %v224
  %256 = vst.msk [vmem:[%s3 + $0x60] sm:$0xff] %vm243, %v229
  %257 = vst.msk [vmem:[%s3 + $0x68] sm:$0xff] %vm243, %v232
  %258 = vst.msk [vmem:[%s3 + $0x70] sm:$0xff] %vm243, %v237
  %259 = vst.msk [vmem:[%s3 + $0x78] sm:$0xff] %vm243, %v240
  %s260 = smul.u32 0, 128
  %v261 = vlaneseq
  %v262 = vshrl.u32 %v261, 7
  %v263 = vadd.s32 %v262, 8
  %v264 = vadd.s32 %v262, 16
  %v265 = vadd.s32 %v262, 24
  %v266 = vadd.s32 %v262, 32
  %v267 = vadd.s32 %v262, 40
  %v268 = vadd.s32 %v262, 48
  %v269 = vadd.s32 %v262, 56
  %v270 = vadd.s32 %v262, 64
  %v271 = vadd.s32 %v262, 72
  %v272 = vadd.s32 %v262, 80
  %v273 = vadd.s32 %v262, 88
  %v274 = vadd.s32 %v262, 96
  %v275 = vadd.s32 %v262, 104
  %v276 = vadd.s32 %v262, 112
  %v277 = vadd.s32 %v262, 120
  %v278 = vstv %s260
  %v279 = vadd.s32 %v278, %v262
  %v280 = vadd.s32 %v278, %v263
  %v281 = vadd.s32 %v278, %v264
  %v282 = vadd.s32 %v278, %v265
  %v283 = vadd.s32 %v278, %v266
  %v284 = vadd.s32 %v278, %v267
  %v285 = vadd.s32 %v278, %v268
  %v286 = vadd.s32 %v278, %v269
  %v287 = vadd.s32 %v278, %v270
  %v288 = vadd.s32 %v278, %v271
  %v289 = vadd.s32 %v278, %v272
  %v290 = vadd.s32 %v278, %v273
  %v291 = vadd.s32 %v278, %v274
  %v292 = vadd.s32 %v278, %v275
  %v293 = vadd.s32 %v278, %v276
  %v294 = vadd.s32 %v278, %v277
  %vm295 = vcmp.lt.s32.totalorder %v279, 128
  %vm296 = vcmp.lt.s32.totalorder %v280, 128
  %vm297 = vcmp.lt.s32.totalorder %v281, 128
  %vm298 = vcmp.lt.s32.totalorder %v282, 128
  %vm299 = vcmp.lt.s32.totalorder %v283, 128
  %vm300 = vcmp.lt.s32.totalorder %v284, 128
  %vm301 = vcmp.lt.s32.totalorder %v285, 128
  %vm302 = vcmp.lt.s32.totalorder %v286, 128
  %vm303 = vcmp.lt.s32.totalorder %v287, 128
  %vm304 = vcmp.lt.s32.totalorder %v288, 128
  %vm305 = vcmp.lt.s32.totalorder %v289, 128
  %vm306 = vcmp.lt.s32.totalorder %v290, 128
  %vm307 = vcmp.lt.s32.totalorder %v291, 128
  %vm308 = vcmp.lt.s32.totalorder %v292, 128
  %vm309 = vcmp.lt.s32.totalorder %v293, 128
  %vm310 = vcmp.lt.s32.totalorder %v294, 128
  %v311 = vsel %vm295, 1, 0
  %v312 = vsel %vm296, 1, 0
  %v313 = vsel %vm297, 1, 0
  %v314 = vsel %vm298, 1, 0
  %v315 = vsel %vm299, 1, 0
  %v316 = vsel %vm300, 1, 0
  %v317 = vsel %vm301, 1, 0
  %v318 = vsel %vm302, 1, 0
  %v319 = vsel %vm303, 1, 0
  %v320 = vsel %vm304, 1, 0
  %v321 = vsel %vm305, 1, 0
  %v322 = vsel %vm306, 1, 0
  %v323 = vsel %vm307, 1, 0
  %v324 = vsel %vm308, 1, 0
  %v325 = vsel %vm309, 1, 0
  %v326 = vsel %vm310, 1, 0
  %vm327 = vcmp.eq.s32.totalorder %v311, 1
  %vm328 = vcmp.eq.s32.totalorder %v312, 1
  %vm329 = vcmp.eq.s32.totalorder %v313, 1
  %vm330 = vcmp.eq.s32.totalorder %v314, 1
  %vm331 = vcmp.eq.s32.totalorder %v315, 1
  %vm332 = vcmp.eq.s32.totalorder %v316, 1
  %vm333 = vcmp.eq.s32.totalorder %v317, 1
  %vm334 = vcmp.eq.s32.totalorder %v318, 1
  %vm335 = vcmp.eq.s32.totalorder %v319, 1
  %vm336 = vcmp.eq.s32.totalorder %v320, 1
  %vm337 = vcmp.eq.s32.totalorder %v321, 1
  %vm338 = vcmp.eq.s32.totalorder %v322, 1
  %vm339 = vcmp.eq.s32.totalorder %v323, 1
  %vm340 = vcmp.eq.s32.totalorder %v324, 1
  %vm341 = vcmp.eq.s32.totalorder %v325, 1
  %vm342 = vcmp.eq.s32.totalorder %v326, 1
  %v343 = vsel %vm327, %v181, 0.0
  %v344 = vsel %vm328, %v184, 0.0
  %v345 = vsel %vm329, %v189, 0.0
  %v346 = vsel %vm330, %v192, 0.0
  %v347 = vsel %vm331, %v197, 0.0
  %v348 = vsel %vm332, %v200, 0.0
  %v349 = vsel %vm333, %v205, 0.0
  %v350 = vsel %vm334, %v208, 0.0
  %v351 = vsel %vm335, %v213, 0.0
  %v352 = vsel %vm336, %v216, 0.0
  %v353 = vsel %vm337, %v221, 0.0
  %v354 = vsel %vm338, %v224, 0.0
  %v355 = vsel %vm339, %v229, 0.0
  %v356 = vsel %vm340, %v232, 0.0
  %v357 = vsel %vm341, %v237, 0.0
  %v358 = vsel %vm342, %v240, 0.0
  %p359 = scmp.eq.s32.totalorder 0, 0
  // Predicated region
  $region14: #{downsample_forward.8} parent=0 // pred_check
    %p360 = pneg %p359
  $region15: #{downsample_forward.8} parent=0 // pred_check_branch
    %362 = sbr.rel (%p360) target = $region17
  $region16: #{downsample_forward.8} parent=0 // pred_region
    %vm363 = vcmask 57344
    %364 = vst.msk [vmem:[%s4] sm:$0x1] %vm363, 0.0
    %365 = vst.msk [vmem:[%s5] sm:$0x1] %vm363, 0.0
  $region17: #{downsample_forward.8} parent=0 // pred_fallthru
    _
  %v366 = vld [vmem:[%s4] sm:$0x1]
  %v367 = vsel %vm243, %v343, 0.0
  %v368 = vsel %vm243, %v344, 0.0
  %v369 = vadd.f32 %v367, %v368
  %v370 = vsel %vm243, %v345, 0.0
  %v371 = vadd.f32 %v369, %v370
  %v372 = vsel %vm243, %v346, 0.0
  %v373 = vadd.f32 %v371, %v372
  %v374 = vsel %vm243, %v347, 0.0
  %v375 = vadd.f32 %v373, %v374
  %v376 = vsel %vm243, %v348, 0.0
  %v377 = vadd.f32 %v375, %v376
  %v378 = vsel %vm243, %v349, 0.0
  %v379 = vadd.f32 %v377, %v378
  %v380 = vsel %vm243, %v350, 0.0
  %v381 = vadd.f32 %v379, %v380
  %v382 = vsel %vm243, %v351, 0.0
  %v383 = vadd.f32 %v381, %v382
  %v384 = vsel %vm243, %v352, 0.0
  %v385 = vadd.f32 %v383, %v384
  %v386 = vsel %vm243, %v353, 0.0
  %v387 = vadd.f32 %v385, %v386
  %v388 = vsel %vm243, %v354, 0.0
  %v389 = vadd.f32 %v387, %v388
  %v390 = vsel %vm243, %v355, 0.0
  %v391 = vadd.f32 %v389, %v390
  %v392 = vsel %vm243, %v356, 0.0
  %v393 = vadd.f32 %v391, %v392
  %v394 = vsel %vm243, %v357, 0.0
  %v395 = vadd.f32 %v393, %v394
  %v396 = vsel %vm243, %v358, 0.0
  %v397 = vadd.f32 %v395, %v396
  %v398 = vrot.slane %v397, 4
  %v399 = vadd.f32 %v397, %v398
  %v400 = vrot.slane %v399, 2
  %v401 = vadd.f32 %v399, %v400
  %v402 = vrot.slane %v401, 1
  %v403 = vadd.f32 %v401, %v402
  %v404 = vadd.f32 %v366, %v403
  %vm405 = vcmask 57344
  %406 = vst.msk [vmem:[%s4] sm:$0x1] %vm405, %v404
  %v407 = vld [vmem:[%s5] sm:$0x1]
  %v408 = vmul.f32 %v343, %v343
  %v409 = vmul.f32 %v344, %v344
  %v410 = vmul.f32 %v345, %v345
  %v411 = vmul.f32 %v346, %v346
  %v412 = vmul.f32 %v347, %v347
  %v413 = vmul.f32 %v348, %v348
  %v414 = vmul.f32 %v349, %v349
  %v415 = vmul.f32 %v350, %v350
  %v416 = vmul.f32 %v351, %v351
  %v417 = vmul.f32 %v352, %v352
  %v418 = vmul.f32 %v353, %v353
  %v419 = vmul.f32 %v354, %v354
  %v420 = vmul.f32 %v355, %v355
  %v421 = vmul.f32 %v356, %v356
  %v422 = vmul.f32 %v357, %v357
  %v423 = vmul.f32 %v358, %v358
  %v424 = vsel %vm243, %v408, 0.0
  %v425 = vsel %vm243, %v409, 0.0
  %v426 = vadd.f32 %v424, %v425
  %v427 = vsel %vm243, %v410, 0.0
  %v428 = vadd.f32 %v426, %v427
  %v429 = vsel %vm243, %v411, 0.0
  %v430 = vadd.f32 %v428, %v429
  %v431 = vsel %vm243, %v412, 0.0
  %v432 = vadd.f32 %v430, %v431
  %v433 = vsel %vm243, %v413, 0.0
  %v434 = vadd.f32 %v432, %v433
  %v435 = vsel %vm243, %v414, 0.0
  %v436 = vadd.f32 %v434, %v435
  %v437 = vsel %vm243, %v415, 0.0
  %v438 = vadd.f32 %v436, %v437
  %v439 = vsel %vm243, %v416, 0.0
  %v440 = vadd.f32 %v438, %v439
  %v441 = vsel %vm243, %v417, 0.0
  %v442 = vadd.f32 %v440, %v441
  %v443 = vsel %vm243, %v418, 0.0
  %v444 = vadd.f32 %v442, %v443
  %v445 = vsel %vm243, %v419, 0.0
  %v446 = vadd.f32 %v444, %v445
  %v447 = vsel %vm243, %v420, 0.0
  %v448 = vadd.f32 %v446, %v447
  %v449 = vsel %vm243, %v421, 0.0
  %v450 = vadd.f32 %v448, %v449
  %v451 = vsel %vm243, %v422, 0.0
  %v452 = vadd.f32 %v450, %v451
  %v453 = vsel %vm243, %v423, 0.0
  %v454 = vadd.f32 %v452, %v453
  %v455 = vrot.slane %v454, 4
  %v456 = vadd.f32 %v454, %v455
  %v457 = vrot.slane %v456, 2
  %v458 = vadd.f32 %v456, %v457
  %v459 = vrot.slane %v458, 1
  %v460 = vadd.f32 %v458, %v459
  %v461 = vadd.f32 %v407, %v460
  %462 = vst.msk [vmem:[%s5] sm:$0x1] %vm405, %v461
  // Predicated region
  $region18: #{downsample_forward.8} parent=0 // pred_check
    _
  $region19: #{downsample_forward.8} parent=0 // pred_check_branch
    %464 = sbr.rel (0) target = $region21
  $region20: #{downsample_forward.8} parent=0 // pred_region
    _
  $region21: #{downsample_forward.8} parent=0 // pred_fallthru
    _
  // Predicated region
  $region22: #{downsample_forward.8} parent=0 // pred_check
    _
  $region23: #{downsample_forward.8} parent=0 // pred_check_branch
    %466 = sbr.rel (0) target = $region25
  $region24: #{downsample_forward.8} parent=0 // pred_region
    _
  $region25: #{downsample_forward.8} parent=0 // pred_fallthru
    _
  // Predicated region
  $region26: #{downsample_forward.8} parent=0 // pred_check
    _
  $region27: #{downsample_forward.8} parent=0 // pred_check_branch
    %468 = sbr.rel (0) target = $region29
  $region28: #{downsample_forward.8} parent=0 // pred_region
    _
  $region29: #{downsample_forward.8} parent=0 // pred_fallthru
    _
  // Predicated region
  $region30: #{downsample_forward.8} parent=0 // pred_check
    _
  $region31: #{downsample_forward.8} parent=0 // pred_check_branch
    %470 = sbr.rel (0) target = $region33
  $region32: #{downsample_forward.8} parent=0 // pred_region
    _
  $region33: #{downsample_forward.8} parent=0 // pred_fallthru
    _
  // Predicated region
  $region34: #{downsample_forward.8} parent=0 // pred_check
    _
  $region35: #{downsample_forward.8} parent=0 // pred_check_branch
    %472 = sbr.rel (0) target = $region37
  $region36: #{downsample_forward.8} parent=0 // pred_region
    _
  $region37: #{downsample_forward.8} parent=0 // pred_fallthru
    _
  // Predicated region
  $region38: #{downsample_forward.8} parent=0 // pred_check
    _
  $region39: #{downsample_forward.8} parent=0 // pred_check_branch
    %474 = sbr.rel (0) target = $region41
  $region40: #{downsample_forward.8} parent=0 // pred_region
    _
  $region41: #{downsample_forward.8} parent=0 // pred_fallthru
    _

</llo_original>
